<compile_context>
chip_gen: v6e
topology: v6e:2x2x1
jax: 0.10.0
libtpu: 0.0.40
codegen_flags: <defaults>
</compile_context>

<pallas_src>
import functools

import jax
import jax.numpy as jnp
from jax.experimental import pallas as pl
from jax.experimental.pallas import tpu as pltpu


def _mlp_kernel(x_ref,
                w1_ref, b1_ref,
                w2_ref, b2_ref,
                w3_ref, b3_ref,
                w4_ref, b4_ref,
                w5_ref, b5_ref,
                w6_ref, b6_ref,
                o_ref):
    def dense(h, w_ref, b_ref):
        # bf16 operands on the MXU, f32 accumulation, f32 bias add.
        z = jnp.dot(h.astype(jnp.bfloat16), w_ref[...],
                    preferred_element_type=jnp.float32)
        return z + b_ref[...]

    h = x_ref[...]                                    # (TB, 1024) f32
    h = jnp.maximum(dense(h, w1_ref, b1_ref), 0.0)
    h = jnp.maximum(dense(h, w2_ref, b2_ref), 0.0)
    h = jnp.maximum(dense(h, w3_ref, b3_ref), 0.0)
    h = jnp.maximum(dense(h, w4_ref, b4_ref), 0.0)
    h = jnp.maximum(dense(h, w5_ref, b5_ref), 0.0)
    z = dense(h, w6_ref, b6_ref)                      # (TB, 2) logits, f32

    # Stable softmax over the 2-wide class axis (kept in f32).
    z = z - jnp.max(z, axis=-1, keepdims=True)
    e = jnp.exp(z)
    o_ref[...] = (e / jnp.sum(e, axis=-1, keepdims=True)).astype(o_ref.dtype)


def _round_up(x, m):
    return ((x + m - 1) // m) * m


@functools.partial(jax.jit, static_argnames=("tb",))
def gnet_mlp_forward(x, params, tb=256):
    """x: (B, 988) float32. params: list of (W, b) with W (in, out)."""
    B, F = x.shape
    f_pad = _round_up(F, 128)                 # 988 -> 1024 lane-aligned K
    tb = min(tb, _round_up(B, 8))             # small batches: one tile
    b_pad = _round_up(B, tb)

    x_p = jnp.pad(x.astype(jnp.float32), ((0, b_pad - B), (0, f_pad - F)))

    flat_args = []
    param_specs = []
    for li, (w, b) in enumerate(params):
        w = w.astype(jnp.float32)
        if li == 0 and w.shape[0] != f_pad:
            w = jnp.pad(w, ((0, f_pad - w.shape[0]), (0, 0)))
        w = w.astype(jnp.bfloat16)            # MXU-native operands
        b = jnp.reshape(b, (1, -1)).astype(jnp.float32)
        flat_args += [w, b]
        param_specs += [
            pl.BlockSpec(w.shape, lambda i: (0, 0)),   # VMEM-resident weights
            pl.BlockSpec(b.shape, lambda i: (0, 0)),
        ]

    out = pl.pallas_call(
        _mlp_kernel,
        out_shape=jax.ShapeDtypeStruct((b_pad, 2), jnp.float32),
        grid=(b_pad // tb,),
        in_specs=[pl.BlockSpec((tb, f_pad), lambda i: (i, 0))] + param_specs,
        out_specs=pl.BlockSpec((tb, 2), lambda i: (i, 0)),
        compiler_params=pltpu.CompilerParams(
            dimension_semantics=("parallel",)),
    )(x_p, *flat_args)
    return out[:B]


def init_params(key):
    """Deterministic init mirroring nn.Linear shapes (stored as (in, out))."""
    dims = [988, 512, 256, 128, 64, 32, 2]
    params = []
    for i in range(len(dims) - 1):
        fan_in, fan_out = dims[i], dims[i + 1]
        key, kw, kb = jax.random.split(key, 3)
        bound = 1.0 / jnp.sqrt(fan_in)
        # PyTorch nn.Linear weight is (out, in); we store the transpose (in, out).
        w = jax.random.uniform(kw, (fan_in, fan_out), jnp.float32, -bound, bound)
        b = jax.random.uniform(kb, (1, fan_out), jnp.float32, -bound, bound)
        params.append((w, b))
    return params


def reference_forward(x, params, matmul_dtype=jnp.float32):
    """Pure-JAX reference. matmul_dtype=bfloat16 mirrors the kernel math."""
    h = x.astype(jnp.float32)
    for i, (w, b) in enumerate(params):
        h = jnp.dot(h.astype(matmul_dtype), w.astype(matmul_dtype),
                    preferred_element_type=jnp.float32) + b.reshape(1, -1)
        if i < len(params) - 1:
            h = jnp.maximum(h, 0.0)
    return jax.nn.softmax(h, axis=-1)


if __name__ == "__main__":
    key = jax.random.PRNGKey(0)
    key, kx = jax.random.split(key)
    B = 8
    x = jax.random.normal(kx, (B, 988), jnp.float32)
    params = init_params(key)

    out = jax.block_until_ready(gnet_mlp_forward(x, params, tb=256))

    assert out.shape == (B, 2)
    assert jnp.allclose(jnp.sum(out, axis=-1), 1.0, atol=1e-5)

    # Strict check against a reference that mirrors the kernel's bf16-operand /
    # f32-accumulation math.
    ref_bf16 = reference_forward(x, params, matmul_dtype=jnp.bfloat16)
    assert jnp.allclose(out, ref_bf16, atol=1e-5, rtol=1e-5)

    # Looser check against the full-f32 module semantics (bf16 rounding only).
    ref_f32 = reference_forward(x, params, matmul_dtype=jnp.float32)
    assert jnp.allclose(out, ref_f32, atol=2e-2)

    print("KERNEL_OK")
</pallas_src>

<mosaic_0001>
module attributes {stable_mosaic.version = 11 : i64} {
  func.func @_mlp_kernel(%arg0: i32, %arg1: memref<8x1024xf32, #tpu.memory_space<vmem>>, %arg2: memref<1024x512xbf16, #tpu.memory_space<vmem>>, %arg3: memref<1x512xf32, #tpu.memory_space<vmem>>, %arg4: memref<512x256xbf16, #tpu.memory_space<vmem>>, %arg5: memref<1x256xf32, #tpu.memory_space<vmem>>, %arg6: memref<256x128xbf16, #tpu.memory_space<vmem>>, %arg7: memref<1x128xf32, #tpu.memory_space<vmem>>, %arg8: memref<128x64xbf16, #tpu.memory_space<vmem>>, %arg9: memref<1x64xf32, #tpu.memory_space<vmem>>, %arg10: memref<64x32xbf16, #tpu.memory_space<vmem>>, %arg11: memref<1x32xf32, #tpu.memory_space<vmem>>, %arg12: memref<32x2xbf16, #tpu.memory_space<vmem>>, %arg13: memref<1x2xf32, #tpu.memory_space<vmem>>, %arg14: memref<8x2xf32, #tpu.memory_space<vmem>>) attributes {dimension_semantics = [#tpu.dimension_semantics<parallel>], iteration_bounds = array<i64: 1>, scalar_prefetch = 0 : i64, scratch_operands = 0 : i64, tpu.core_type = #tpu.core_type<tc>, window_params = [{transform_indices = @transform_0, window_bounds = array<i64: 8, 1024>}, {pipeline_mode = #tpu.pipeline_mode<synchronous>, transform_indices = @transform_1, window_bounds = array<i64: 1024, 512>}, {pipeline_mode = #tpu.pipeline_mode<synchronous>, transform_indices = @transform_2, window_bounds = array<i64: 1, 512>}, {pipeline_mode = #tpu.pipeline_mode<synchronous>, transform_indices = @transform_3, window_bounds = array<i64: 512, 256>}, {pipeline_mode = #tpu.pipeline_mode<synchronous>, transform_indices = @transform_4, window_bounds = array<i64: 1, 256>}, {pipeline_mode = #tpu.pipeline_mode<synchronous>, transform_indices = @transform_5, window_bounds = array<i64: 256, 128>}, {pipeline_mode = #tpu.pipeline_mode<synchronous>, transform_indices = @transform_6, window_bounds = array<i64: 1, 128>}, {pipeline_mode = #tpu.pipeline_mode<synchronous>, transform_indices = @transform_7, window_bounds = array<i64: 128, 64>}, {pipeline_mode = #tpu.pipeline_mode<synchronous>, transform_indices = @transform_8, window_bounds = array<i64: 1, 64>}, {pipeline_mode = #tpu.pipeline_mode<synchronous>, transform_indices = @transform_9, window_bounds = array<i64: 64, 32>}, {pipeline_mode = #tpu.pipeline_mode<synchronous>, transform_indices = @transform_10, window_bounds = array<i64: 1, 32>}, {pipeline_mode = #tpu.pipeline_mode<synchronous>, transform_indices = @transform_11, window_bounds = array<i64: 32, 2>}, {pipeline_mode = #tpu.pipeline_mode<synchronous>, transform_indices = @transform_12, window_bounds = array<i64: 1, 2>}, {transform_indices = @transform_13, window_bounds = array<i64: 8, 2>}]} {
    %c0 = arith.constant 0 : index
    %c0_0 = arith.constant 0 : index
    %0 = vector.load %arg1[%c0, %c0_0] : memref<8x1024xf32, #tpu.memory_space<vmem>>, vector<8x1024xf32>
    %1 = arith.truncf %0 : vector<8x1024xf32> to vector<8x1024xbf16>
    %c0_1 = arith.constant 0 : index
    %c0_2 = arith.constant 0 : index
    %2 = vector.load %arg2[%c0_1, %c0_2] : memref<1024x512xbf16, #tpu.memory_space<vmem>>, vector<1024x512xbf16>
    %cst = arith.constant dense<0.000000e+00> : vector<8x512xf32>
    %3 = tpu.matmul %1, %2, %cst {dimension_numbers = #tpu.dot_dimension_numbers<[1], [0], [0], [1], [0, 0, 1, 1], [], []>} : vector<8x1024xbf16>, vector<1024x512xbf16>, vector<8x512xf32> -> vector<8x512xf32>
    %c0_3 = arith.constant 0 : index
    %c0_4 = arith.constant 0 : index
    %4 = vector.load %arg3[%c0_3, %c0_4] : memref<1x512xf32, #tpu.memory_space<vmem>>, vector<1x512xf32>
    %5 = vector.broadcast %4 : vector<1x512xf32> to vector<8x512xf32>
    %6 = arith.addf %3, %5 : vector<8x512xf32>
    %cst_5 = arith.constant 0.000000e+00 : f32
    %7 = vector.broadcast %cst_5 : f32 to vector<8x512xf32>
    %8 = arith.maximumf %6, %7 : vector<8x512xf32>
    %9 = arith.truncf %8 : vector<8x512xf32> to vector<8x512xbf16>
    %c0_6 = arith.constant 0 : index
    %c0_7 = arith.constant 0 : index
    %10 = vector.load %arg4[%c0_6, %c0_7] : memref<512x256xbf16, #tpu.memory_space<vmem>>, vector<512x256xbf16>
    %cst_8 = arith.constant dense<0.000000e+00> : vector<8x256xf32>
    %11 = tpu.matmul %9, %10, %cst_8 {dimension_numbers = #tpu.dot_dimension_numbers<[1], [0], [0], [1], [0, 0, 1, 1], [], []>} : vector<8x512xbf16>, vector<512x256xbf16>, vector<8x256xf32> -> vector<8x256xf32>
    %c0_9 = arith.constant 0 : index
    %c0_10 = arith.constant 0 : index
    %12 = vector.load %arg5[%c0_9, %c0_10] : memref<1x256xf32, #tpu.memory_space<vmem>>, vector<1x256xf32>
    %13 = vector.broadcast %12 : vector<1x256xf32> to vector<8x256xf32>
    %14 = arith.addf %11, %13 : vector<8x256xf32>
    %cst_11 = arith.constant 0.000000e+00 : f32
    %15 = vector.broadcast %cst_11 : f32 to vector<8x256xf32>
    %16 = arith.maximumf %14, %15 : vector<8x256xf32>
    %17 = arith.truncf %16 : vector<8x256xf32> to vector<8x256xbf16>
    %c0_12 = arith.constant 0 : index
    %c0_13 = arith.constant 0 : index
    %18 = vector.load %arg6[%c0_12, %c0_13] : memref<256x128xbf16, #tpu.memory_space<vmem>>, vector<256x128xbf16>
    %cst_14 = arith.constant dense<0.000000e+00> : vector<8x128xf32>
    %19 = tpu.matmul %17, %18, %cst_14 {dimension_numbers = #tpu.dot_dimension_numbers<[1], [0], [0], [1], [0, 0, 1, 1], [], []>} : vector<8x256xbf16>, vector<256x128xbf16>, vector<8x128xf32> -> vector<8x128xf32>
    %c0_15 = arith.constant 0 : index
    %c0_16 = arith.constant 0 : index
    %20 = vector.load %arg7[%c0_15, %c0_16] : memref<1x128xf32, #tpu.memory_space<vmem>>, vector<1x128xf32>
    %21 = vector.broadcast %20 : vector<1x128xf32> to vector<8x128xf32>
    %22 = arith.addf %19, %21 : vector<8x128xf32>
    %cst_17 = arith.constant 0.000000e+00 : f32
    %23 = vector.broadcast %cst_17 : f32 to vector<8x128xf32>
    %24 = arith.maximumf %22, %23 : vector<8x128xf32>
    %25 = arith.truncf %24 : vector<8x128xf32> to vector<8x128xbf16>
    %c0_18 = arith.constant 0 : index
    %c0_19 = arith.constant 0 : index
    %26 = vector.load %arg8[%c0_18, %c0_19] : memref<128x64xbf16, #tpu.memory_space<vmem>>, vector<128x64xbf16>
    %cst_20 = arith.constant dense<0.000000e+00> : vector<8x64xf32>
    %27 = tpu.matmul %25, %26, %cst_20 {dimension_numbers = #tpu.dot_dimension_numbers<[1], [0], [0], [1], [0, 0, 1, 1], [], []>} : vector<8x128xbf16>, vector<128x64xbf16>, vector<8x64xf32> -> vector<8x64xf32>
    %c0_21 = arith.constant 0 : index
    %c0_22 = arith.constant 0 : index
    %28 = vector.load %arg9[%c0_21, %c0_22] : memref<1x64xf32, #tpu.memory_space<vmem>>, vector<1x64xf32>
    %29 = vector.broadcast %28 : vector<1x64xf32> to vector<8x64xf32>
    %30 = arith.addf %27, %29 : vector<8x64xf32>
    %cst_23 = arith.constant 0.000000e+00 : f32
    %31 = vector.broadcast %cst_23 : f32 to vector<8x64xf32>
    %32 = arith.maximumf %30, %31 : vector<8x64xf32>
    %33 = arith.truncf %32 : vector<8x64xf32> to vector<8x64xbf16>
    %c0_24 = arith.constant 0 : index
    %c0_25 = arith.constant 0 : index
    %34 = vector.load %arg10[%c0_24, %c0_25] : memref<64x32xbf16, #tpu.memory_space<vmem>>, vector<64x32xbf16>
    %cst_26 = arith.constant dense<0.000000e+00> : vector<8x32xf32>
    %35 = tpu.matmul %33, %34, %cst_26 {dimension_numbers = #tpu.dot_dimension_numbers<[1], [0], [0], [1], [0, 0, 1, 1], [], []>} : vector<8x64xbf16>, vector<64x32xbf16>, vector<8x32xf32> -> vector<8x32xf32>
    %c0_27 = arith.constant 0 : index
    %c0_28 = arith.constant 0 : index
    %36 = vector.load %arg11[%c0_27, %c0_28] : memref<1x32xf32, #tpu.memory_space<vmem>>, vector<1x32xf32>
    %37 = vector.broadcast %36 : vector<1x32xf32> to vector<8x32xf32>
    %38 = arith.addf %35, %37 : vector<8x32xf32>
    %cst_29 = arith.constant 0.000000e+00 : f32
    %39 = vector.broadcast %cst_29 : f32 to vector<8x32xf32>
    %40 = arith.maximumf %38, %39 : vector<8x32xf32>
    %41 = arith.truncf %40 : vector<8x32xf32> to vector<8x32xbf16>
    %c0_30 = arith.constant 0 : index
    %c0_31 = arith.constant 0 : index
    %42 = vector.load %arg12[%c0_30, %c0_31] : memref<32x2xbf16, #tpu.memory_space<vmem>>, vector<32x2xbf16>
    %cst_32 = arith.constant dense<0.000000e+00> : vector<8x2xf32>
    %43 = tpu.matmul %41, %42, %cst_32 {dimension_numbers = #tpu.dot_dimension_numbers<[1], [0], [0], [1], [0, 0, 1, 1], [], []>} : vector<8x32xbf16>, vector<32x2xbf16>, vector<8x2xf32> -> vector<8x2xf32>
    %c0_33 = arith.constant 0 : index
    %c0_34 = arith.constant 0 : index
    %44 = vector.load %arg13[%c0_33, %c0_34] : memref<1x2xf32, #tpu.memory_space<vmem>>, vector<1x2xf32>
    %45 = vector.broadcast %44 : vector<1x2xf32> to vector<8x2xf32>
    %46 = arith.addf %43, %45 : vector<8x2xf32>
    %cst_35 = arith.constant dense<0xFF800000> : vector<8xf32>
    %47 = vector.multi_reduction <maximumf>, %46, %cst_35 [1] : vector<8x2xf32> to vector<8xf32>
    %48 = vector.shape_cast %47 : vector<8xf32> to vector<8x1xf32>
    %49 = vector.broadcast %48 : vector<8x1xf32> to vector<8x2xf32>
    %50 = arith.subf %46, %49 : vector<8x2xf32>
    %51 = math.exp %50 : vector<8x2xf32>
    %cst_36 = arith.constant dense<0.000000e+00> : vector<8xf32>
    %52 = vector.multi_reduction <add>, %51, %cst_36 [1] : vector<8x2xf32> to vector<8xf32>
    %53 = vector.shape_cast %52 : vector<8xf32> to vector<8x1xf32>
    %54 = vector.broadcast %53 : vector<8x1xf32> to vector<8x2xf32>
    %55 = arith.divf %51, %54 : vector<8x2xf32>
    %c0_37 = arith.constant 0 : index
    %c0_38 = arith.constant 0 : index
    %56 = vector.load %arg14[%c0_37, %c0_38] : memref<8x2xf32, #tpu.memory_space<vmem>>, vector<8x2xf32>
    tpu.vector_store %arg14[%c0_37, %c0_38], %55 {strides = array<i32>} : memref<8x2xf32, #tpu.memory_space<vmem>>, vector<8x2xf32>,
    return
  }
  func.func @transform_0(%arg0: i32) -> (i32, i32) {
    %c0_i32 = arith.constant 0 : i32
    %c0_i32_0 = arith.constant 0 : i32
    return %arg0, %c0_i32 : i32, i32
  }
  func.func @transform_1(%arg0: i32) -> (i32, i32) {
    %c0_i32 = arith.constant 0 : i32
    %c0_i32_0 = arith.constant 0 : i32
    %c0_i32_1 = arith.constant 0 : i32
    return %c0_i32, %c0_i32_0 : i32, i32
  }
  func.func @transform_2(%arg0: i32) -> (i32, i32) {
    %c0_i32 = arith.constant 0 : i32
    %c0_i32_0 = arith.constant 0 : i32
    %c0_i32_1 = arith.constant 0 : i32
    return %c0_i32, %c0_i32_0 : i32, i32
  }
  func.func @transform_3(%arg0: i32) -> (i32, i32) {
    %c0_i32 = arith.constant 0 : i32
    %c0_i32_0 = arith.constant 0 : i32
    %c0_i32_1 = arith.constant 0 : i32
    return %c0_i32, %c0_i32_0 : i32, i32
  }
  func.func @transform_4(%arg0: i32) -> (i32, i32) {
    %c0_i32 = arith.constant 0 : i32
    %c0_i32_0 = arith.constant 0 : i32
    %c0_i32_1 = arith.constant 0 : i32
    return %c0_i32, %c0_i32_0 : i32, i32
  }
  func.func @transform_5(%arg0: i32) -> (i32, i32) {
    %c0_i32 = arith.constant 0 : i32
    %c0_i32_0 = arith.constant 0 : i32
    %c0_i32_1 = arith.constant 0 : i32
    return %c0_i32, %c0_i32_0 : i32, i32
  }
  func.func @transform_6(%arg0: i32) -> (i32, i32) {
    %c0_i32 = arith.constant 0 : i32
    %c0_i32_0 = arith.constant 0 : i32
    %c0_i32_1 = arith.constant 0 : i32
    return %c0_i32, %c0_i32_0 : i32, i32
  }
  func.func @transform_7(%arg0: i32) -> (i32, i32) {
    %c0_i32 = arith.constant 0 : i32
    %c0_i32_0 = arith.constant 0 : i32
    %c0_i32_1 = arith.constant 0 : i32
    return %c0_i32, %c0_i32_0 : i32, i32
  }
  func.func @transform_8(%arg0: i32) -> (i32, i32) {
    %c0_i32 = arith.constant 0 : i32
    %c0_i32_0 = arith.constant 0 : i32
    %c0_i32_1 = arith.constant 0 : i32
    return %c0_i32, %c0_i32_0 : i32, i32
  }
  func.func @transform_9(%arg0: i32) -> (i32, i32) {
    %c0_i32 = arith.constant 0 : i32
    %c0_i32_0 = arith.constant 0 : i32
    %c0_i32_1 = arith.constant 0 : i32
    return %c0_i32, %c0_i32_0 : i32, i32
  }
  func.func @transform_10(%arg0: i32) -> (i32, i32) {
    %c0_i32 = arith.constant 0 : i32
    %c0_i32_0 = arith.constant 0 : i32
    %c0_i32_1 = arith.constant 0 : i32
    return %c0_i32, %c0_i32_0 : i32, i32
  }
  func.func @transform_11(%arg0: i32) -> (i32, i32) {
    %c0_i32 = arith.constant 0 : i32
    %c0_i32_0 = arith.constant 0 : i32
    %c0_i32_1 = arith.constant 0 : i32
    return %c0_i32, %c0_i32_0 : i32, i32
  }
  func.func @transform_12(%arg0: i32) -> (i32, i32) {
    %c0_i32 = arith.constant 0 : i32
    %c0_i32_0 = arith.constant 0 : i32
    %c0_i32_1 = arith.constant 0 : i32
    return %c0_i32, %c0_i32_0 : i32, i32
  }
  func.func @transform_13(%arg0: i32) -> (i32, i32) {
    %c0_i32 = arith.constant 0 : i32
    %c0_i32_0 = arith.constant 0 : i32
    return %arg0, %c0_i32 : i32, i32
  }
}

</mosaic_0001>

<llo_original>
// kernel: gnet_mlp_forward.1
$region0: #{gnet_mlp_forward.1}
  #allocation0 [shape = 'u32[]', space=smem, size = 0x4, offset = 0x4, fixed_abs, tag = 'smem constant byte address 0x4 - core index']
  #allocation1 [shape = 'u32[144,128]{1,0:T(1,128)}', space=vmem, size = 0x12000, scoped, tag = 'internal scratch']
  %s0 = inlined_call_operand.vmem [shape: f32[8,1024], index: 0, kind: input, shape index: {}]
  %s1 = inlined_call_operand.vmem [shape: bf16[1024,512], index: 1, kind: input, shape index: {}]
  %s2 = inlined_call_operand.vmem [shape: f32[1,512], index: 2, kind: input, shape index: {}]
  %s3 = inlined_call_operand.vmem [shape: bf16[512,256], index: 3, kind: input, shape index: {}]
  %s4 = inlined_call_operand.vmem [shape: f32[1,256], index: 4, kind: input, shape index: {}]
  %s5 = inlined_call_operand.vmem [shape: bf16[256,128], index: 5, kind: input, shape index: {}]
  %s6 = inlined_call_operand.vmem [shape: f32[1,128], index: 6, kind: input, shape index: {}]
  %s7 = inlined_call_operand.vmem [shape: bf16[128,64], index: 7, kind: input, shape index: {}]
  %s8 = inlined_call_operand.vmem [shape: f32[1,64], index: 8, kind: input, shape index: {}]
  %s9 = inlined_call_operand.vmem [shape: bf16[64,32], index: 9, kind: input, shape index: {}]
  %s10 = inlined_call_operand.vmem [shape: f32[1,32], index: 10, kind: input, shape index: {}]
  %s11 = inlined_call_operand.vmem [shape: bf16[32,2], index: 11, kind: input, shape index: {}]
  %s12 = inlined_call_operand.vmem [shape: f32[1,2], index: 12, kind: input, shape index: {}]
  %s13 = inlined_call_operand.vmem [shape: f32[8,2], index: 13, kind: output, shape index: {}]
  %s14 = sld [smem:[#allocation0]]
  $region62: #{gnet_mlp_forward.1} parent=0
    _
  %s16 = ssub.s32 1, %s14
  %s17 = scalar_select 0, %s16, %s14
  // Predicated region
  $region2: #{gnet_mlp_forward.1} parent=0 // pred_check
    _
  $region3: #{gnet_mlp_forward.1} parent=0 // pred_check_branch
    %19 = sbr.rel (0) target = $region5
  $region4: #{gnet_mlp_forward.1} parent=0 // pred_region
    _
  $region5: #{gnet_mlp_forward.1} parent=0 // pred_fallthru
    _
  // Predicated region
  $region6: #{gnet_mlp_forward.1} parent=0 // pred_check
    _
  $region7: #{gnet_mlp_forward.1} parent=0 // pred_check_branch
    %21 = sbr.rel (0) target = $region9
  $region8: #{gnet_mlp_forward.1} parent=0 // pred_region
    _
  $region9: #{gnet_mlp_forward.1} parent=0 // pred_fallthru
    _
  // Predicated region
  $region10: #{gnet_mlp_forward.1} parent=0 // pred_check
    _
  $region11: #{gnet_mlp_forward.1} parent=0 // pred_check_branch
    %23 = sbr.rel (0) target = $region13
  $region12: #{gnet_mlp_forward.1} parent=0 // pred_region
    _
  $region13: #{gnet_mlp_forward.1} parent=0 // pred_fallthru
    _
  // Predicated region
  $region14: #{gnet_mlp_forward.1} parent=0 // pred_check
    _
  $region15: #{gnet_mlp_forward.1} parent=0 // pred_check_branch
    %25 = sbr.rel (0) target = $region17
  $region16: #{gnet_mlp_forward.1} parent=0 // pred_region
    _
  $region17: #{gnet_mlp_forward.1} parent=0 // pred_fallthru
    _
  // Predicated region
  $region18: #{gnet_mlp_forward.1} parent=0 // pred_check
    _
  $region19: #{gnet_mlp_forward.1} parent=0 // pred_check_branch
    %27 = sbr.rel (0) target = $region21
  $region20: #{gnet_mlp_forward.1} parent=0 // pred_region
    _
  $region21: #{gnet_mlp_forward.1} parent=0 // pred_fallthru
    _
  // Predicated region
  $region22: #{gnet_mlp_forward.1} parent=0 // pred_check
    _
  $region23: #{gnet_mlp_forward.1} parent=0 // pred_check_branch
    %29 = sbr.rel (0) target = $region25
  $region24: #{gnet_mlp_forward.1} parent=0 // pred_region
    _
  $region25: #{gnet_mlp_forward.1} parent=0 // pred_fallthru
    _
  // Predicated region
  $region26: #{gnet_mlp_forward.1} parent=0 // pred_check
    _
  $region27: #{gnet_mlp_forward.1} parent=0 // pred_check_branch
    %31 = sbr.rel (0) target = $region29
  $region28: #{gnet_mlp_forward.1} parent=0 // pred_region
    _
  $region29: #{gnet_mlp_forward.1} parent=0 // pred_fallthru
    _
  // Predicated region
  $region30: #{gnet_mlp_forward.1} parent=0 // pred_check
    _
  $region31: #{gnet_mlp_forward.1} parent=0 // pred_check_branch
    %33 = sbr.rel (0) target = $region33
  $region32: #{gnet_mlp_forward.1} parent=0 // pred_region
    _
  $region33: #{gnet_mlp_forward.1} parent=0 // pred_fallthru
    _
  // Predicated region
  $region34: #{gnet_mlp_forward.1} parent=0 // pred_check
    _
  $region35: #{gnet_mlp_forward.1} parent=0 // pred_check_branch
    %35 = sbr.rel (0) target = $region37
  $region36: #{gnet_mlp_forward.1} parent=0 // pred_region
    _
  $region37: #{gnet_mlp_forward.1} parent=0 // pred_fallthru
    _
  // Predicated region
  $region38: #{gnet_mlp_forward.1} parent=0 // pred_check
    _
  $region39: #{gnet_mlp_forward.1} parent=0 // pred_check_branch
    %37 = sbr.rel (0) target = $region41
  $region40: #{gnet_mlp_forward.1} parent=0 // pred_region
    _
  $region41: #{gnet_mlp_forward.1} parent=0 // pred_fallthru
    _
  // Predicated region
  $region42: #{gnet_mlp_forward.1} parent=0 // pred_check
    _
  $region43: #{gnet_mlp_forward.1} parent=0 // pred_check_branch
    %39 = sbr.rel (0) target = $region45
  $region44: #{gnet_mlp_forward.1} parent=0 // pred_region
    _
  $region45: #{gnet_mlp_forward.1} parent=0 // pred_fallthru
    _
  // Predicated region
  $region46: #{gnet_mlp_forward.1} parent=0 // pred_check
    _
  $region47: #{gnet_mlp_forward.1} parent=0 // pred_check_branch
    %41 = sbr.rel (0) target = $region49
  $region48: #{gnet_mlp_forward.1} parent=0 // pred_region
    _
  $region49: #{gnet_mlp_forward.1} parent=0 // pred_fallthru
    _
  // Predicated region
  $region50: #{gnet_mlp_forward.1} parent=0 // pred_check
    _
  $region51: #{gnet_mlp_forward.1} parent=0 // pred_check_branch
    %43 = sbr.rel (0) target = $region53
  $region52: #{gnet_mlp_forward.1} parent=0 // pred_region
    _
  $region53: #{gnet_mlp_forward.1} parent=0 // pred_fallthru
    _
  %v45 = vld [vmem:[%s0] sm:$0xff]
  %v46 = vld [vmem:[%s0 + $0x8] sm:$0xff]
  %v47 = vld [vmem:[%s0 + $0x10] sm:$0xff]
  %v48 = vld [vmem:[%s0 + $0x18] sm:$0xff]
  %v49 = vld [vmem:[%s0 + $0x20] sm:$0xff]
  %v50 = vld [vmem:[%s0 + $0x28] sm:$0xff]
  %v51 = vld [vmem:[%s0 + $0x30] sm:$0xff]
  %v52 = vld [vmem:[%s0 + $0x38] sm:$0xff]
  %v53 = vpack.c.bf16 %v45, %v45
  %v54 = vpack.c.bf16 %v46, %v46
  %v55 = vpack.c.bf16 %v47, %v47
  %v56 = vpack.c.bf16 %v48, %v48
  %v57 = vpack.c.bf16 %v49, %v49
  %v58 = vpack.c.bf16 %v50, %v50
  %v59 = vpack.c.bf16 %v51, %v51
  %v60 = vpack.c.bf16 %v52, %v52
  %v61 = vld [vmem:[%s1] sm:$0xff]
  %v62 = vld [vmem:[%s1 + $0x8] sm:$0xff]
  %v63 = vld [vmem:[%s1 + $0x10] sm:$0xff]
  %v64 = vld [vmem:[%s1 + $0x18] sm:$0xff]
  %v65 = vld [vmem:[%s1 + $0x20] sm:$0xff]
  %v66 = vld [vmem:[%s1 + $0x28] sm:$0xff]
  %v67 = vld [vmem:[%s1 + $0x30] sm:$0xff]
  %v68 = vld [vmem:[%s1 + $0x38] sm:$0xff]
  %v69 = vld [vmem:[%s1 + $0x40] sm:$0xff]
  %v70 = vld [vmem:[%s1 + $0x48] sm:$0xff]
  %v71 = vld [vmem:[%s1 + $0x50] sm:$0xff]
  %v72 = vld [vmem:[%s1 + $0x58] sm:$0xff]
  %v73 = vld [vmem:[%s1 + $0x60] sm:$0xff]
  %v74 = vld [vmem:[%s1 + $0x68] sm:$0xff]
  %v75 = vld [vmem:[%s1 + $0x70] sm:$0xff]
  %v76 = vld [vmem:[%s1 + $0x78] sm:$0xff]
  %v77 = vld [vmem:[%s1 + $0x80] sm:$0xff]
  %v78 = vld [vmem:[%s1 + $0x88] sm:$0xff]
  %v79 = vld [vmem:[%s1 + $0x90] sm:$0xff]
  %v80 = vld [vmem:[%s1 + $0x98] sm:$0xff]
  %v81 = vld [vmem:[%s1 + $0xa0] sm:$0xff]
  %v82 = vld [vmem:[%s1 + $0xa8] sm:$0xff]
  %v83 = vld [vmem:[%s1 + $0xb0] sm:$0xff]
  %v84 = vld [vmem:[%s1 + $0xb8] sm:$0xff]
  %v85 = vld [vmem:[%s1 + $0xc0] sm:$0xff]
  %v86 = vld [vmem:[%s1 + $0xc8] sm:$0xff]
  %v87 = vld [vmem:[%s1 + $0xd0] sm:$0xff]
  %v88 = vld [vmem:[%s1 + $0xd8] sm:$0xff]
  %v89 = vld [vmem:[%s1 + $0xe0] sm:$0xff]
  %v90 = vld [vmem:[%s1 + $0xe8] sm:$0xff]
  %v91 = vld [vmem:[%s1 + $0xf0] sm:$0xff]
  %v92 = vld [vmem:[%s1 + $0xf8] sm:$0xff]
  %v93 = vld [vmem:[%s1 + $0x100] sm:$0xff]
  %v94 = vld [vmem:[%s1 + $0x108] sm:$0xff]
  %v95 = vld [vmem:[%s1 + $0x110] sm:$0xff]
  %v96 = vld [vmem:[%s1 + $0x118] sm:$0xff]
  %v97 = vld [vmem:[%s1 + $0x120] sm:$0xff]
  %v98 = vld [vmem:[%s1 + $0x128] sm:$0xff]
  %v99 = vld [vmem:[%s1 + $0x130] sm:$0xff]
  %v100 = vld [vmem:[%s1 + $0x138] sm:$0xff]
  %v101 = vld [vmem:[%s1 + $0x140] sm:$0xff]
  %v102 = vld [vmem:[%s1 + $0x148] sm:$0xff]
  %v103 = vld [vmem:[%s1 + $0x150] sm:$0xff]
  %v104 = vld [vmem:[%s1 + $0x158] sm:$0xff]
  %v105 = vld [vmem:[%s1 + $0x160] sm:$0xff]
  %v106 = vld [vmem:[%s1 + $0x168] sm:$0xff]
  %v107 = vld [vmem:[%s1 + $0x170] sm:$0xff]
  %v108 = vld [vmem:[%s1 + $0x178] sm:$0xff]
  %v109 = vld [vmem:[%s1 + $0x180] sm:$0xff]
  %v110 = vld [vmem:[%s1 + $0x188] sm:$0xff]
  %v111 = vld [vmem:[%s1 + $0x190] sm:$0xff]
  %v112 = vld [vmem:[%s1 + $0x198] sm:$0xff]
  %v113 = vld [vmem:[%s1 + $0x1a0] sm:$0xff]
  %v114 = vld [vmem:[%s1 + $0x1a8] sm:$0xff]
  %v115 = vld [vmem:[%s1 + $0x1b0] sm:$0xff]
  %v116 = vld [vmem:[%s1 + $0x1b8] sm:$0xff]
  %v117 = vld [vmem:[%s1 + $0x1c0] sm:$0xff]
  %v118 = vld [vmem:[%s1 + $0x1c8] sm:$0xff]
  %v119 = vld [vmem:[%s1 + $0x1d0] sm:$0xff]
  %v120 = vld [vmem:[%s1 + $0x1d8] sm:$0xff]
  %v121 = vld [vmem:[%s1 + $0x1e0] sm:$0xff]
  %v122 = vld [vmem:[%s1 + $0x1e8] sm:$0xff]
  %v123 = vld [vmem:[%s1 + $0x1f0] sm:$0xff]
  %v124 = vld [vmem:[%s1 + $0x1f8] sm:$0xff]
  %v125 = vld [vmem:[%s1 + $0x200] sm:$0xff]
  %v126 = vld [vmem:[%s1 + $0x208] sm:$0xff]
  %v127 = vld [vmem:[%s1 + $0x210] sm:$0xff]
  %v128 = vld [vmem:[%s1 + $0x218] sm:$0xff]
  %v129 = vld [vmem:[%s1 + $0x220] sm:$0xff]
  %v130 = vld [vmem:[%s1 + $0x228] sm:$0xff]
  %v131 = vld [vmem:[%s1 + $0x230] sm:$0xff]
  %v132 = vld [vmem:[%s1 + $0x238] sm:$0xff]
  %v133 = vld [vmem:[%s1 + $0x240] sm:$0xff]
  %v134 = vld [vmem:[%s1 + $0x248] sm:$0xff]
  %v135 = vld [vmem:[%s1 + $0x250] sm:$0xff]
  %v136 = vld [vmem:[%s1 + $0x258] sm:$0xff]
  %v137 = vld [vmem:[%s1 + $0x260] sm:$0xff]
  %v138 = vld [vmem:[%s1 + $0x268] sm:$0xff]
  %v139 = vld [vmem:[%s1 + $0x270] sm:$0xff]
  %v140 = vld [vmem:[%s1 + $0x278] sm:$0xff]
  %v141 = vld [vmem:[%s1 + $0x280] sm:$0xff]
  %v142 = vld [vmem:[%s1 + $0x288] sm:$0xff]
  %v143 = vld [vmem:[%s1 + $0x290] sm:$0xff]
  %v144 = vld [vmem:[%s1 + $0x298] sm:$0xff]
  %v145 = vld [vmem:[%s1 + $0x2a0] sm:$0xff]
  %v146 = vld [vmem:[%s1 + $0x2a8] sm:$0xff]
  %v147 = vld [vmem:[%s1 + $0x2b0] sm:$0xff]
  %v148 = vld [vmem:[%s1 + $0x2b8] sm:$0xff]
  %v149 = vld [vmem:[%s1 + $0x2c0] sm:$0xff]
  %v150 = vld [vmem:[%s1 + $0x2c8] sm:$0xff]
  %v151 = vld [vmem:[%s1 + $0x2d0] sm:$0xff]
  %v152 = vld [vmem:[%s1 + $0x2d8] sm:$0xff]
  %v153 = vld [vmem:[%s1 + $0x2e0] sm:$0xff]
  %v154 = vld [vmem:[%s1 + $0x2e8] sm:$0xff]
  %v155 = vld [vmem:[%s1 + $0x2f0] sm:$0xff]
  %v156 = vld [vmem:[%s1 + $0x2f8] sm:$0xff]
  %v157 = vld [vmem:[%s1 + $0x300] sm:$0xff]
  %v158 = vld [vmem:[%s1 + $0x308] sm:$0xff]
  %v159 = vld [vmem:[%s1 + $0x310] sm:$0xff]
  %v160 = vld [vmem:[%s1 + $0x318] sm:$0xff]
  %v161 = vld [vmem:[%s1 + $0x320] sm:$0xff]
  %v162 = vld [vmem:[%s1 + $0x328] sm:$0xff]
  %v163 = vld [vmem:[%s1 + $0x330] sm:$0xff]
  %v164 = vld [vmem:[%s1 + $0x338] sm:$0xff]
  %v165 = vld [vmem:[%s1 + $0x340] sm:$0xff]
  %v166 = vld [vmem:[%s1 + $0x348] sm:$0xff]
  %v167 = vld [vmem:[%s1 + $0x350] sm:$0xff]
  %v168 = vld [vmem:[%s1 + $0x358] sm:$0xff]
  %v169 = vld [vmem:[%s1 + $0x360] sm:$0xff]
  %v170 = vld [vmem:[%s1 + $0x368] sm:$0xff]
  %v171 = vld [vmem:[%s1 + $0x370] sm:$0xff]
  %v172 = vld [vmem:[%s1 + $0x378] sm:$0xff]
  %v173 = vld [vmem:[%s1 + $0x380] sm:$0xff]
  %v174 = vld [vmem:[%s1 + $0x388] sm:$0xff]
  %v175 = vld [vmem:[%s1 + $0x390] sm:$0xff]
  %v176 = vld [vmem:[%s1 + $0x398] sm:$0xff]
  %v177 = vld [vmem:[%s1 + $0x3a0] sm:$0xff]
  %v178 = vld [vmem:[%s1 + $0x3a8] sm:$0xff]
  %v179 = vld [vmem:[%s1 + $0x3b0] sm:$0xff]
  %v180 = vld [vmem:[%s1 + $0x3b8] sm:$0xff]
  %v181 = vld [vmem:[%s1 + $0x3c0] sm:$0xff]
  %v182 = vld [vmem:[%s1 + $0x3c8] sm:$0xff]
  %v183 = vld [vmem:[%s1 + $0x3d0] sm:$0xff]
  %v184 = vld [vmem:[%s1 + $0x3d8] sm:$0xff]
  %v185 = vld [vmem:[%s1 + $0x3e0] sm:$0xff]
  %v186 = vld [vmem:[%s1 + $0x3e8] sm:$0xff]
  %v187 = vld [vmem:[%s1 + $0x3f0] sm:$0xff]
  %v188 = vld [vmem:[%s1 + $0x3f8] sm:$0xff]
  %v189 = vld [vmem:[%s1 + $0x400] sm:$0xff]
  %v190 = vld [vmem:[%s1 + $0x408] sm:$0xff]
  %v191 = vld [vmem:[%s1 + $0x410] sm:$0xff]
  %v192 = vld [vmem:[%s1 + $0x418] sm:$0xff]
  %v193 = vld [vmem:[%s1 + $0x420] sm:$0xff]
  %v194 = vld [vmem:[%s1 + $0x428] sm:$0xff]
  %v195 = vld [vmem:[%s1 + $0x430] sm:$0xff]
  %v196 = vld [vmem:[%s1 + $0x438] sm:$0xff]
  %v197 = vld [vmem:[%s1 + $0x440] sm:$0xff]
  %v198 = vld [vmem:[%s1 + $0x448] sm:$0xff]
  %v199 = vld [vmem:[%s1 + $0x450] sm:$0xff]
  %v200 = vld [vmem:[%s1 + $0x458] sm:$0xff]
  %v201 = vld [vmem:[%s1 + $0x460] sm:$0xff]
  %v202 = vld [vmem:[%s1 + $0x468] sm:$0xff]
  %v203 = vld [vmem:[%s1 + $0x470] sm:$0xff]
  %v204 = vld [vmem:[%s1 + $0x478] sm:$0xff]
  %v205 = vld [vmem:[%s1 + $0x480] sm:$0xff]
  %v206 = vld [vmem:[%s1 + $0x488] sm:$0xff]
  %v207 = vld [vmem:[%s1 + $0x490] sm:$0xff]
  %v208 = vld [vmem:[%s1 + $0x498] sm:$0xff]
  %v209 = vld [vmem:[%s1 + $0x4a0] sm:$0xff]
  %v210 = vld [vmem:[%s1 + $0x4a8] sm:$0xff]
  %v211 = vld [vmem:[%s1 + $0x4b0] sm:$0xff]
  %v212 = vld [vmem:[%s1 + $0x4b8] sm:$0xff]
  %v213 = vld [vmem:[%s1 + $0x4c0] sm:$0xff]
  %v214 = vld [vmem:[%s1 + $0x4c8] sm:$0xff]
  %v215 = vld [vmem:[%s1 + $0x4d0] sm:$0xff]
  %v216 = vld [vmem:[%s1 + $0x4d8] sm:$0xff]
  %v217 = vld [vmem:[%s1 + $0x4e0] sm:$0xff]
  %v218 = vld [vmem:[%s1 + $0x4e8] sm:$0xff]
  %v219 = vld [vmem:[%s1 + $0x4f0] sm:$0xff]
  %v220 = vld [vmem:[%s1 + $0x4f8] sm:$0xff]
  %v221 = vld [vmem:[%s1 + $0x500] sm:$0xff]
  %v222 = vld [vmem:[%s1 + $0x508] sm:$0xff]
  %v223 = vld [vmem:[%s1 + $0x510] sm:$0xff]
  %v224 = vld [vmem:[%s1 + $0x518] sm:$0xff]
  %v225 = vld [vmem:[%s1 + $0x520] sm:$0xff]
  %v226 = vld [vmem:[%s1 + $0x528] sm:$0xff]
  %v227 = vld [vmem:[%s1 + $0x530] sm:$0xff]
  %v228 = vld [vmem:[%s1 + $0x538] sm:$0xff]
  %v229 = vld [vmem:[%s1 + $0x540] sm:$0xff]
  %v230 = vld [vmem:[%s1 + $0x548] sm:$0xff]
  %v231 = vld [vmem:[%s1 + $0x550] sm:$0xff]
  %v232 = vld [vmem:[%s1 + $0x558] sm:$0xff]
  %v233 = vld [vmem:[%s1 + $0x560] sm:$0xff]
  %v234 = vld [vmem:[%s1 + $0x568] sm:$0xff]
  %v235 = vld [vmem:[%s1 + $0x570] sm:$0xff]
  %v236 = vld [vmem:[%s1 + $0x578] sm:$0xff]
  %v237 = vld [vmem:[%s1 + $0x580] sm:$0xff]
  %v238 = vld [vmem:[%s1 + $0x588] sm:$0xff]
  %v239 = vld [vmem:[%s1 + $0x590] sm:$0xff]
  %v240 = vld [vmem:[%s1 + $0x598] sm:$0xff]
  %v241 = vld [vmem:[%s1 + $0x5a0] sm:$0xff]
  %v242 = vld [vmem:[%s1 + $0x5a8] sm:$0xff]
  %v243 = vld [vmem:[%s1 + $0x5b0] sm:$0xff]
  %v244 = vld [vmem:[%s1 + $0x5b8] sm:$0xff]
  %v245 = vld [vmem:[%s1 + $0x5c0] sm:$0xff]
  %v246 = vld [vmem:[%s1 + $0x5c8] sm:$0xff]
  %v247 = vld [vmem:[%s1 + $0x5d0] sm:$0xff]
  %v248 = vld [vmem:[%s1 + $0x5d8] sm:$0xff]
  %v249 = vld [vmem:[%s1 + $0x5e0] sm:$0xff]
  %v250 = vld [vmem:[%s1 + $0x5e8] sm:$0xff]
  %v251 = vld [vmem:[%s1 + $0x5f0] sm:$0xff]
  %v252 = vld [vmem:[%s1 + $0x5f8] sm:$0xff]
  %v253 = vld [vmem:[%s1 + $0x600] sm:$0xff]
  %v254 = vld [vmem:[%s1 + $0x608] sm:$0xff]
  %v255 = vld [vmem:[%s1 + $0x610] sm:$0xff]
  %v256 = vld [vmem:[%s1 + $0x618] sm:$0xff]
  %v257 = vld [vmem:[%s1 + $0x620] sm:$0xff]
  %v258 = vld [vmem:[%s1 + $0x628] sm:$0xff]
  %v259 = vld [vmem:[%s1 + $0x630] sm:$0xff]
  %v260 = vld [vmem:[%s1 + $0x638] sm:$0xff]
  %v261 = vld [vmem:[%s1 + $0x640] sm:$0xff]
  %v262 = vld [vmem:[%s1 + $0x648] sm:$0xff]
  %v263 = vld [vmem:[%s1 + $0x650] sm:$0xff]
  %v264 = vld [vmem:[%s1 + $0x658] sm:$0xff]
  %v265 = vld [vmem:[%s1 + $0x660] sm:$0xff]
  %v266 = vld [vmem:[%s1 + $0x668] sm:$0xff]
  %v267 = vld [vmem:[%s1 + $0x670] sm:$0xff]
  %v268 = vld [vmem:[%s1 + $0x678] sm:$0xff]
  %v269 = vld [vmem:[%s1 + $0x680] sm:$0xff]
  %v270 = vld [vmem:[%s1 + $0x688] sm:$0xff]
  %v271 = vld [vmem:[%s1 + $0x690] sm:$0xff]
  %v272 = vld [vmem:[%s1 + $0x698] sm:$0xff]
  %v273 = vld [vmem:[%s1 + $0x6a0] sm:$0xff]
  %v274 = vld [vmem:[%s1 + $0x6a8] sm:$0xff]
  %v275 = vld [vmem:[%s1 + $0x6b0] sm:$0xff]
  %v276 = vld [vmem:[%s1 + $0x6b8] sm:$0xff]
  %v277 = vld [vmem:[%s1 + $0x6c0] sm:$0xff]
  %v278 = vld [vmem:[%s1 + $0x6c8] sm:$0xff]
  %v279 = vld [vmem:[%s1 + $0x6d0] sm:$0xff]
  %v280 = vld [vmem:[%s1 + $0x6d8] sm:$0xff]
  %v281 = vld [vmem:[%s1 + $0x6e0] sm:$0xff]
  %v282 = vld [vmem:[%s1 + $0x6e8] sm:$0xff]
  %v283 = vld [vmem:[%s1 + $0x6f0] sm:$0xff]
  %v284 = vld [vmem:[%s1 + $0x6f8] sm:$0xff]
  %v285 = vld [vmem:[%s1 + $0x700] sm:$0xff]
  %v286 = vld [vmem:[%s1 + $0x708] sm:$0xff]
  %v287 = vld [vmem:[%s1 + $0x710] sm:$0xff]
  %v288 = vld [vmem:[%s1 + $0x718] sm:$0xff]
  %v289 = vld [vmem:[%s1 + $0x720] sm:$0xff]
  %v290 = vld [vmem:[%s1 + $0x728] sm:$0xff]
  %v291 = vld [vmem:[%s1 + $0x730] sm:$0xff]
  %v292 = vld [vmem:[%s1 + $0x738] sm:$0xff]
  %v293 = vld [vmem:[%s1 + $0x740] sm:$0xff]
  %v294 = vld [vmem:[%s1 + $0x748] sm:$0xff]
  %v295 = vld [vmem:[%s1 + $0x750] sm:$0xff]
  %v296 = vld [vmem:[%s1 + $0x758] sm:$0xff]
  %v297 = vld [vmem:[%s1 + $0x760] sm:$0xff]
  %v298 = vld [vmem:[%s1 + $0x768] sm:$0xff]
  %v299 = vld [vmem:[%s1 + $0x770] sm:$0xff]
  %v300 = vld [vmem:[%s1 + $0x778] sm:$0xff]
  %v301 = vld [vmem:[%s1 + $0x780] sm:$0xff]
  %v302 = vld [vmem:[%s1 + $0x788] sm:$0xff]
  %v303 = vld [vmem:[%s1 + $0x790] sm:$0xff]
  %v304 = vld [vmem:[%s1 + $0x798] sm:$0xff]
  %v305 = vld [vmem:[%s1 + $0x7a0] sm:$0xff]
  %v306 = vld [vmem:[%s1 + $0x7a8] sm:$0xff]
  %v307 = vld [vmem:[%s1 + $0x7b0] sm:$0xff]
  %v308 = vld [vmem:[%s1 + $0x7b8] sm:$0xff]
  %v309 = vld [vmem:[%s1 + $0x7c0] sm:$0xff]
  %v310 = vld [vmem:[%s1 + $0x7c8] sm:$0xff]
  %v311 = vld [vmem:[%s1 + $0x7d0] sm:$0xff]
  %v312 = vld [vmem:[%s1 + $0x7d8] sm:$0xff]
  %v313 = vld [vmem:[%s1 + $0x7e0] sm:$0xff]
  %v314 = vld [vmem:[%s1 + $0x7e8] sm:$0xff]
  %v315 = vld [vmem:[%s1 + $0x7f0] sm:$0xff]
  %v316 = vld [vmem:[%s1 + $0x7f8] sm:$0xff]
  %v317 = vld [vmem:[%s2] sm:$0xf]
  %v319 = vlaneseq
  %v320 = vshrl.u32 %v319, 7
  %v321 = vsub.s32 0, %v320
  %v322 = vrot.slane %v317, %v321
  %v323 = vlaneseq
  %v324 = vshrl.u32 %v323, 7
  %v325 = vsub.s32 1, %v324
  %v326 = vrot.slane %v317, %v325
  %v327 = vlaneseq
  %v328 = vshrl.u32 %v327, 7
  %v329 = vsub.s32 2, %v328
  %v330 = vrot.slane %v317, %v329
  %v331 = vlaneseq
  %v332 = vshrl.u32 %v331, 7
  %v333 = vsub.s32 3, %v332
  %v334 = vrot.slane %v317, %v333
  %v595 = vunpack.c.l.b16 %v61
  %v596 = vunpack.c.h.b16 %v61
  %v597 = vunpack.c.l.b16 %v62
  %v598 = vunpack.c.h.b16 %v62
  %v599 = vunpack.c.l.b16 %v63
  %v600 = vunpack.c.h.b16 %v63
  %v601 = vunpack.c.l.b16 %v64
  %v602 = vunpack.c.h.b16 %v64
  %v603 = vunpack.c.l.b16 %v65
  %v604 = vunpack.c.h.b16 %v65
  %v605 = vunpack.c.l.b16 %v66
  %v606 = vunpack.c.h.b16 %v66
  %v607 = vunpack.c.l.b16 %v67
  %v608 = vunpack.c.h.b16 %v67
  %v609 = vunpack.c.l.b16 %v68
  %v610 = vunpack.c.h.b16 %v68
  %v611 = vunpack.c.l.b16 %v69
  %v612 = vunpack.c.h.b16 %v69
  %v613 = vunpack.c.l.b16 %v70
  %v614 = vunpack.c.h.b16 %v70
  %v615 = vunpack.c.l.b16 %v71
  %v616 = vunpack.c.h.b16 %v71
  %v617 = vunpack.c.l.b16 %v72
  %v618 = vunpack.c.h.b16 %v72
  %v619 = vunpack.c.l.b16 %v73
  %v620 = vunpack.c.h.b16 %v73
  %v621 = vunpack.c.l.b16 %v74
  %v622 = vunpack.c.h.b16 %v74
  %v623 = vunpack.c.l.b16 %v75
  %v624 = vunpack.c.h.b16 %v75
  %v625 = vunpack.c.l.b16 %v76
  %v626 = vunpack.c.h.b16 %v76
  %v627 = vunpack.c.l.b16 %v77
  %v628 = vunpack.c.h.b16 %v77
  %v629 = vunpack.c.l.b16 %v78
  %v630 = vunpack.c.h.b16 %v78
  %v631 = vunpack.c.l.b16 %v79
  %v632 = vunpack.c.h.b16 %v79
  %v633 = vunpack.c.l.b16 %v80
  %v634 = vunpack.c.h.b16 %v80
  %v635 = vunpack.c.l.b16 %v81
  %v636 = vunpack.c.h.b16 %v81
  %v637 = vunpack.c.l.b16 %v82
  %v638 = vunpack.c.h.b16 %v82
  %v639 = vunpack.c.l.b16 %v83
  %v640 = vunpack.c.h.b16 %v83
  %v641 = vunpack.c.l.b16 %v84
  %v642 = vunpack.c.h.b16 %v84
  %v643 = vunpack.c.l.b16 %v85
  %v644 = vunpack.c.h.b16 %v85
  %v645 = vunpack.c.l.b16 %v86
  %v646 = vunpack.c.h.b16 %v86
  %v647 = vunpack.c.l.b16 %v87
  %v648 = vunpack.c.h.b16 %v87
  %v649 = vunpack.c.l.b16 %v88
  %v650 = vunpack.c.h.b16 %v88
  %v651 = vunpack.c.l.b16 %v89
  %v652 = vunpack.c.h.b16 %v89
  %v653 = vunpack.c.l.b16 %v90
  %v654 = vunpack.c.h.b16 %v90
  %v655 = vunpack.c.l.b16 %v91
  %v656 = vunpack.c.h.b16 %v91
  %v657 = vunpack.c.l.b16 %v92
  %v658 = vunpack.c.h.b16 %v92
  %v659 = vunpack.c.l.b16 %v93
  %v660 = vunpack.c.h.b16 %v93
  %v661 = vunpack.c.l.b16 %v94
  %v662 = vunpack.c.h.b16 %v94
  %v663 = vunpack.c.l.b16 %v95
  %v664 = vunpack.c.h.b16 %v95
  %v665 = vunpack.c.l.b16 %v96
  %v666 = vunpack.c.h.b16 %v96
  %v667 = vunpack.c.l.b16 %v97
  %v668 = vunpack.c.h.b16 %v97
  %v669 = vunpack.c.l.b16 %v98
  %v670 = vunpack.c.h.b16 %v98
  %v671 = vunpack.c.l.b16 %v99
  %v672 = vunpack.c.h.b16 %v99
  %v673 = vunpack.c.l.b16 %v100
  %v674 = vunpack.c.h.b16 %v100
  %v675 = vunpack.c.l.b16 %v101
  %v676 = vunpack.c.h.b16 %v101
  %v677 = vunpack.c.l.b16 %v102
  %v678 = vunpack.c.h.b16 %v102
  %v679 = vunpack.c.l.b16 %v103
  %v680 = vunpack.c.h.b16 %v103
  %v681 = vunpack.c.l.b16 %v104
  %v682 = vunpack.c.h.b16 %v104
  %v683 = vunpack.c.l.b16 %v105
  %v684 = vunpack.c.h.b16 %v105
  %v685 = vunpack.c.l.b16 %v106
  %v686 = vunpack.c.h.b16 %v106
  %v687 = vunpack.c.l.b16 %v107
  %v688 = vunpack.c.h.b16 %v107
  %v689 = vunpack.c.l.b16 %v108
  %v690 = vunpack.c.h.b16 %v108
  %v691 = vunpack.c.l.b16 %v109
  %v692 = vunpack.c.h.b16 %v109
  %v693 = vunpack.c.l.b16 %v110
  %v694 = vunpack.c.h.b16 %v110
  %v695 = vunpack.c.l.b16 %v111
  %v696 = vunpack.c.h.b16 %v111
  %v697 = vunpack.c.l.b16 %v112
  %v698 = vunpack.c.h.b16 %v112
  %v699 = vunpack.c.l.b16 %v113
  %v700 = vunpack.c.h.b16 %v113
  %v701 = vunpack.c.l.b16 %v114
  %v702 = vunpack.c.h.b16 %v114
  %v703 = vunpack.c.l.b16 %v115
  %v704 = vunpack.c.h.b16 %v115
  %v705 = vunpack.c.l.b16 %v116
  %v706 = vunpack.c.h.b16 %v116
  %v707 = vunpack.c.l.b16 %v117
  %v708 = vunpack.c.h.b16 %v117
  %v709 = vunpack.c.l.b16 %v118
  %v710 = vunpack.c.h.b16 %v118
  %v711 = vunpack.c.l.b16 %v119
  %v712 = vunpack.c.h.b16 %v119
  %v713 = vunpack.c.l.b16 %v120
  %v714 = vunpack.c.h.b16 %v120
  %v715 = vunpack.c.l.b16 %v121
  %v716 = vunpack.c.h.b16 %v121
  %v717 = vunpack.c.l.b16 %v122
  %v718 = vunpack.c.h.b16 %v122
  %v719 = vunpack.c.l.b16 %v123
  %v720 = vunpack.c.h.b16 %v123
  %v721 = vunpack.c.l.b16 %v124
  %v722 = vunpack.c.h.b16 %v124
  %v723 = vunpack.c.l.b16 %v125
  %v724 = vunpack.c.h.b16 %v125
  %v725 = vunpack.c.l.b16 %v126
  %v726 = vunpack.c.h.b16 %v126
  %v727 = vunpack.c.l.b16 %v127
  %v728 = vunpack.c.h.b16 %v127
  %v729 = vunpack.c.l.b16 %v128
  %v730 = vunpack.c.h.b16 %v128
  %v731 = vunpack.c.l.b16 %v129
  %v732 = vunpack.c.h.b16 %v129
  %v733 = vunpack.c.l.b16 %v130
  %v734 = vunpack.c.h.b16 %v130
  %v735 = vunpack.c.l.b16 %v131
  %v736 = vunpack.c.h.b16 %v131
  %v737 = vunpack.c.l.b16 %v132
  %v738 = vunpack.c.h.b16 %v132
  %v739 = vunpack.c.l.b16 %v133
  %v740 = vunpack.c.h.b16 %v133
  %v741 = vunpack.c.l.b16 %v134
  %v742 = vunpack.c.h.b16 %v134
  %v743 = vunpack.c.l.b16 %v135
  %v744 = vunpack.c.h.b16 %v135
  %v745 = vunpack.c.l.b16 %v136
  %v746 = vunpack.c.h.b16 %v136
  %v747 = vunpack.c.l.b16 %v137
  %v748 = vunpack.c.h.b16 %v137
  %v749 = vunpack.c.l.b16 %v138
  %v750 = vunpack.c.h.b16 %v138
  %v751 = vunpack.c.l.b16 %v139
  %v752 = vunpack.c.h.b16 %v139
  %v753 = vunpack.c.l.b16 %v140
  %v754 = vunpack.c.h.b16 %v140
  %v755 = vunpack.c.l.b16 %v141
  %v756 = vunpack.c.h.b16 %v141
  %v757 = vunpack.c.l.b16 %v142
  %v758 = vunpack.c.h.b16 %v142
  %v759 = vunpack.c.l.b16 %v143
  %v760 = vunpack.c.h.b16 %v143
  %v761 = vunpack.c.l.b16 %v144
  %v762 = vunpack.c.h.b16 %v144
  %v763 = vunpack.c.l.b16 %v145
  %v764 = vunpack.c.h.b16 %v145
  %v765 = vunpack.c.l.b16 %v146
  %v766 = vunpack.c.h.b16 %v146
  %v767 = vunpack.c.l.b16 %v147
  %v768 = vunpack.c.h.b16 %v147
  %v769 = vunpack.c.l.b16 %v148
  %v770 = vunpack.c.h.b16 %v148
  %v771 = vunpack.c.l.b16 %v149
  %v772 = vunpack.c.h.b16 %v149
  %v773 = vunpack.c.l.b16 %v150
  %v774 = vunpack.c.h.b16 %v150
  %v775 = vunpack.c.l.b16 %v151
  %v776 = vunpack.c.h.b16 %v151
  %v777 = vunpack.c.l.b16 %v152
  %v778 = vunpack.c.h.b16 %v152
  %v779 = vunpack.c.l.b16 %v153
  %v780 = vunpack.c.h.b16 %v153
  %v781 = vunpack.c.l.b16 %v154
  %v782 = vunpack.c.h.b16 %v154
  %v783 = vunpack.c.l.b16 %v155
  %v784 = vunpack.c.h.b16 %v155
  %v785 = vunpack.c.l.b16 %v156
  %v786 = vunpack.c.h.b16 %v156
  %v787 = vunpack.c.l.b16 %v157
  %v788 = vunpack.c.h.b16 %v157
  %v789 = vunpack.c.l.b16 %v158
  %v790 = vunpack.c.h.b16 %v158
  %v791 = vunpack.c.l.b16 %v159
  %v792 = vunpack.c.h.b16 %v159
  %v793 = vunpack.c.l.b16 %v160
  %v794 = vunpack.c.h.b16 %v160
  %v795 = vunpack.c.l.b16 %v161
  %v796 = vunpack.c.h.b16 %v161
  %v797 = vunpack.c.l.b16 %v162
  %v798 = vunpack.c.h.b16 %v162
  %v799 = vunpack.c.l.b16 %v163
  %v800 = vunpack.c.h.b16 %v163
  %v801 = vunpack.c.l.b16 %v164
  %v802 = vunpack.c.h.b16 %v164
  %v803 = vunpack.c.l.b16 %v165
  %v804 = vunpack.c.h.b16 %v165
  %v805 = vunpack.c.l.b16 %v166
  %v806 = vunpack.c.h.b16 %v166
  %v807 = vunpack.c.l.b16 %v167
  %v808 = vunpack.c.h.b16 %v167
  %v809 = vunpack.c.l.b16 %v168
  %v810 = vunpack.c.h.b16 %v168
  %v811 = vunpack.c.l.b16 %v169
  %v812 = vunpack.c.h.b16 %v169
  %v813 = vunpack.c.l.b16 %v170
  %v814 = vunpack.c.h.b16 %v170
  %v815 = vunpack.c.l.b16 %v171
  %v816 = vunpack.c.h.b16 %v171
  %v817 = vunpack.c.l.b16 %v172
  %v818 = vunpack.c.h.b16 %v172
  %v819 = vunpack.c.l.b16 %v173
  %v820 = vunpack.c.h.b16 %v173
  %v821 = vunpack.c.l.b16 %v174
  %v822 = vunpack.c.h.b16 %v174
  %v823 = vunpack.c.l.b16 %v175
  %v824 = vunpack.c.h.b16 %v175
  %v825 = vunpack.c.l.b16 %v176
  %v826 = vunpack.c.h.b16 %v176
  %v827 = vunpack.c.l.b16 %v177
  %v828 = vunpack.c.h.b16 %v177
  %v829 = vunpack.c.l.b16 %v178
  %v830 = vunpack.c.h.b16 %v178
  %v831 = vunpack.c.l.b16 %v179
  %v832 = vunpack.c.h.b16 %v179
  %v833 = vunpack.c.l.b16 %v180
  %v834 = vunpack.c.h.b16 %v180
  %v835 = vunpack.c.l.b16 %v181
  %v836 = vunpack.c.h.b16 %v181
  %v837 = vunpack.c.l.b16 %v182
  %v838 = vunpack.c.h.b16 %v182
  %v839 = vunpack.c.l.b16 %v183
  %v840 = vunpack.c.h.b16 %v183
  %v841 = vunpack.c.l.b16 %v184
  %v842 = vunpack.c.h.b16 %v184
  %v843 = vunpack.c.l.b16 %v185
  %v844 = vunpack.c.h.b16 %v185
  %v845 = vunpack.c.l.b16 %v186
  %v846 = vunpack.c.h.b16 %v186
  %v847 = vunpack.c.l.b16 %v187
  %v848 = vunpack.c.h.b16 %v187
  %v849 = vunpack.c.l.b16 %v188
  %v850 = vunpack.c.h.b16 %v188
  %v851 = vunpack.c.l.b16 %v189
  %v852 = vunpack.c.h.b16 %v189
  %v853 = vunpack.c.l.b16 %v190
  %v854 = vunpack.c.h.b16 %v190
  %v855 = vunpack.c.l.b16 %v191
  %v856 = vunpack.c.h.b16 %v191
  %v857 = vunpack.c.l.b16 %v192
  %v858 = vunpack.c.h.b16 %v192
  %v859 = vunpack.c.l.b16 %v193
  %v860 = vunpack.c.h.b16 %v193
  %v861 = vunpack.c.l.b16 %v194
  %v862 = vunpack.c.h.b16 %v194
  %v863 = vunpack.c.l.b16 %v195
  %v864 = vunpack.c.h.b16 %v195
  %v865 = vunpack.c.l.b16 %v196
  %v866 = vunpack.c.h.b16 %v196
  %v867 = vunpack.c.l.b16 %v197
  %v868 = vunpack.c.h.b16 %v197
  %v869 = vunpack.c.l.b16 %v198
  %v870 = vunpack.c.h.b16 %v198
  %v871 = vunpack.c.l.b16 %v199
  %v872 = vunpack.c.h.b16 %v199
  %v873 = vunpack.c.l.b16 %v200
  %v874 = vunpack.c.h.b16 %v200
  %v875 = vunpack.c.l.b16 %v201
  %v876 = vunpack.c.h.b16 %v201
  %v877 = vunpack.c.l.b16 %v202
  %v878 = vunpack.c.h.b16 %v202
  %v879 = vunpack.c.l.b16 %v203
  %v880 = vunpack.c.h.b16 %v203
  %v881 = vunpack.c.l.b16 %v204
  %v882 = vunpack.c.h.b16 %v204
  %v883 = vunpack.c.l.b16 %v205
  %v884 = vunpack.c.h.b16 %v205
  %v885 = vunpack.c.l.b16 %v206
  %v886 = vunpack.c.h.b16 %v206
  %v887 = vunpack.c.l.b16 %v207
  %v888 = vunpack.c.h.b16 %v207
  %v889 = vunpack.c.l.b16 %v208
  %v890 = vunpack.c.h.b16 %v208
  %v891 = vunpack.c.l.b16 %v209
  %v892 = vunpack.c.h.b16 %v209
  %v893 = vunpack.c.l.b16 %v210
  %v894 = vunpack.c.h.b16 %v210
  %v895 = vunpack.c.l.b16 %v211
  %v896 = vunpack.c.h.b16 %v211
  %v897 = vunpack.c.l.b16 %v212
  %v898 = vunpack.c.h.b16 %v212
  %v899 = vunpack.c.l.b16 %v213
  %v900 = vunpack.c.h.b16 %v213
  %v901 = vunpack.c.l.b16 %v214
  %v902 = vunpack.c.h.b16 %v214
  %v903 = vunpack.c.l.b16 %v215
  %v904 = vunpack.c.h.b16 %v215
  %v905 = vunpack.c.l.b16 %v216
  %v906 = vunpack.c.h.b16 %v216
  %v907 = vunpack.c.l.b16 %v217
  %v908 = vunpack.c.h.b16 %v217
  %v909 = vunpack.c.l.b16 %v218
  %v910 = vunpack.c.h.b16 %v218
  %v911 = vunpack.c.l.b16 %v219
  %v912 = vunpack.c.h.b16 %v219
  %v913 = vunpack.c.l.b16 %v220
  %v914 = vunpack.c.h.b16 %v220
  %v915 = vunpack.c.l.b16 %v221
  %v916 = vunpack.c.h.b16 %v221
  %v917 = vunpack.c.l.b16 %v222
  %v918 = vunpack.c.h.b16 %v222
  %v919 = vunpack.c.l.b16 %v223
  %v920 = vunpack.c.h.b16 %v223
  %v921 = vunpack.c.l.b16 %v224
  %v922 = vunpack.c.h.b16 %v224
  %v923 = vunpack.c.l.b16 %v225
  %v924 = vunpack.c.h.b16 %v225
  %v925 = vunpack.c.l.b16 %v226
  %v926 = vunpack.c.h.b16 %v226
  %v927 = vunpack.c.l.b16 %v227
  %v928 = vunpack.c.h.b16 %v227
  %v929 = vunpack.c.l.b16 %v228
  %v930 = vunpack.c.h.b16 %v228
  %v931 = vunpack.c.l.b16 %v229
  %v932 = vunpack.c.h.b16 %v229
  %v933 = vunpack.c.l.b16 %v230
  %v934 = vunpack.c.h.b16 %v230
  %v935 = vunpack.c.l.b16 %v231
  %v936 = vunpack.c.h.b16 %v231
  %v937 = vunpack.c.l.b16 %v232
  %v938 = vunpack.c.h.b16 %v232
  %v939 = vunpack.c.l.b16 %v233
  %v940 = vunpack.c.h.b16 %v233
  %v941 = vunpack.c.l.b16 %v234
  %v942 = vunpack.c.h.b16 %v234
  %v943 = vunpack.c.l.b16 %v235
  %v944 = vunpack.c.h.b16 %v235
  %v945 = vunpack.c.l.b16 %v236
  %v946 = vunpack.c.h.b16 %v236
  %v947 = vunpack.c.l.b16 %v237
  %v948 = vunpack.c.h.b16 %v237
  %v949 = vunpack.c.l.b16 %v238
  %v950 = vunpack.c.h.b16 %v238
  %v951 = vunpack.c.l.b16 %v239
  %v952 = vunpack.c.h.b16 %v239
  %v953 = vunpack.c.l.b16 %v240
  %v954 = vunpack.c.h.b16 %v240
  %v955 = vunpack.c.l.b16 %v241
  %v956 = vunpack.c.h.b16 %v241
  %v957 = vunpack.c.l.b16 %v242
  %v958 = vunpack.c.h.b16 %v242
  %v959 = vunpack.c.l.b16 %v243
  %v960 = vunpack.c.h.b16 %v243
  %v961 = vunpack.c.l.b16 %v244
  %v962 = vunpack.c.h.b16 %v244
  %v963 = vunpack.c.l.b16 %v245
  %v964 = vunpack.c.h.b16 %v245
  %v965 = vunpack.c.l.b16 %v246
  %v966 = vunpack.c.h.b16 %v246
  %v967 = vunpack.c.l.b16 %v247
  %v968 = vunpack.c.h.b16 %v247
  %v969 = vunpack.c.l.b16 %v248
  %v970 = vunpack.c.h.b16 %v248
  %v971 = vunpack.c.l.b16 %v249
  %v972 = vunpack.c.h.b16 %v249
  %v973 = vunpack.c.l.b16 %v250
  %v974 = vunpack.c.h.b16 %v250
  %v975 = vunpack.c.l.b16 %v251
  %v976 = vunpack.c.h.b16 %v251
  %v977 = vunpack.c.l.b16 %v252
  %v978 = vunpack.c.h.b16 %v252
  %v979 = vunpack.c.l.b16 %v253
  %v980 = vunpack.c.h.b16 %v253
  %v981 = vunpack.c.l.b16 %v254
  %v982 = vunpack.c.h.b16 %v254
  %v983 = vunpack.c.l.b16 %v255
  %v984 = vunpack.c.h.b16 %v255
  %v985 = vunpack.c.l.b16 %v256
  %v986 = vunpack.c.h.b16 %v256
  %v987 = vunpack.c.l.b16 %v257
  %v988 = vunpack.c.h.b16 %v257
  %v989 = vunpack.c.l.b16 %v258
  %v990 = vunpack.c.h.b16 %v258
  %v991 = vunpack.c.l.b16 %v259
  %v992 = vunpack.c.h.b16 %v259
  %v993 = vunpack.c.l.b16 %v260
  %v994 = vunpack.c.h.b16 %v260
  %v995 = vunpack.c.l.b16 %v261
  %v996 = vunpack.c.h.b16 %v261
  %v997 = vunpack.c.l.b16 %v262
  %v998 = vunpack.c.h.b16 %v262
  %v999 = vunpack.c.l.b16 %v263
  %v1000 = vunpack.c.h.b16 %v263
  %v1001 = vunpack.c.l.b16 %v264
  %v1002 = vunpack.c.h.b16 %v264
  %v1003 = vunpack.c.l.b16 %v265
  %v1004 = vunpack.c.h.b16 %v265
  %v1005 = vunpack.c.l.b16 %v266
  %v1006 = vunpack.c.h.b16 %v266
  %v1007 = vunpack.c.l.b16 %v267
  %v1008 = vunpack.c.h.b16 %v267
  %v1009 = vunpack.c.l.b16 %v268
  %v1010 = vunpack.c.h.b16 %v268
  %v1011 = vunpack.c.l.b16 %v269
  %v1012 = vunpack.c.h.b16 %v269
  %v1013 = vunpack.c.l.b16 %v270
  %v1014 = vunpack.c.h.b16 %v270
  %v1015 = vunpack.c.l.b16 %v271
  %v1016 = vunpack.c.h.b16 %v271
  %v1017 = vunpack.c.l.b16 %v272
  %v1018 = vunpack.c.h.b16 %v272
  %v1019 = vunpack.c.l.b16 %v273
  %v1020 = vunpack.c.h.b16 %v273
  %v1021 = vunpack.c.l.b16 %v274
  %v1022 = vunpack.c.h.b16 %v274
  %v1023 = vunpack.c.l.b16 %v275
  %v1024 = vunpack.c.h.b16 %v275
  %v1025 = vunpack.c.l.b16 %v276
  %v1026 = vunpack.c.h.b16 %v276
  %v1027 = vunpack.c.l.b16 %v277
  %v1028 = vunpack.c.h.b16 %v277
  %v1029 = vunpack.c.l.b16 %v278
  %v1030 = vunpack.c.h.b16 %v278
  %v1031 = vunpack.c.l.b16 %v279
  %v1032 = vunpack.c.h.b16 %v279
  %v1033 = vunpack.c.l.b16 %v280
  %v1034 = vunpack.c.h.b16 %v280
  %v1035 = vunpack.c.l.b16 %v281
  %v1036 = vunpack.c.h.b16 %v281
  %v1037 = vunpack.c.l.b16 %v282
  %v1038 = vunpack.c.h.b16 %v282
  %v1039 = vunpack.c.l.b16 %v283
  %v1040 = vunpack.c.h.b16 %v283
  %v1041 = vunpack.c.l.b16 %v284
  %v1042 = vunpack.c.h.b16 %v284
  %v1043 = vunpack.c.l.b16 %v285
  %v1044 = vunpack.c.h.b16 %v285
  %v1045 = vunpack.c.l.b16 %v286
  %v1046 = vunpack.c.h.b16 %v286
  %v1047 = vunpack.c.l.b16 %v287
  %v1048 = vunpack.c.h.b16 %v287
  %v1049 = vunpack.c.l.b16 %v288
  %v1050 = vunpack.c.h.b16 %v288
  %v1051 = vunpack.c.l.b16 %v289
  %v1052 = vunpack.c.h.b16 %v289
  %v1053 = vunpack.c.l.b16 %v290
  %v1054 = vunpack.c.h.b16 %v290
  %v1055 = vunpack.c.l.b16 %v291
  %v1056 = vunpack.c.h.b16 %v291
  %v1057 = vunpack.c.l.b16 %v292
  %v1058 = vunpack.c.h.b16 %v292
  %v1059 = vunpack.c.l.b16 %v293
  %v1060 = vunpack.c.h.b16 %v293
  %v1061 = vunpack.c.l.b16 %v294
  %v1062 = vunpack.c.h.b16 %v294
  %v1063 = vunpack.c.l.b16 %v295
  %v1064 = vunpack.c.h.b16 %v295
  %v1065 = vunpack.c.l.b16 %v296
  %v1066 = vunpack.c.h.b16 %v296
  %v1067 = vunpack.c.l.b16 %v297
  %v1068 = vunpack.c.h.b16 %v297
  %v1069 = vunpack.c.l.b16 %v298
  %v1070 = vunpack.c.h.b16 %v298
  %v1071 = vunpack.c.l.b16 %v299
  %v1072 = vunpack.c.h.b16 %v299
  %v1073 = vunpack.c.l.b16 %v300
  %v1074 = vunpack.c.h.b16 %v300
  %v1075 = vunpack.c.l.b16 %v301
  %v1076 = vunpack.c.h.b16 %v301
  %v1077 = vunpack.c.l.b16 %v302
  %v1078 = vunpack.c.h.b16 %v302
  %v1079 = vunpack.c.l.b16 %v303
  %v1080 = vunpack.c.h.b16 %v303
  %v1081 = vunpack.c.l.b16 %v304
  %v1082 = vunpack.c.h.b16 %v304
  %v1083 = vunpack.c.l.b16 %v305
  %v1084 = vunpack.c.h.b16 %v305
  %v1085 = vunpack.c.l.b16 %v306
  %v1086 = vunpack.c.h.b16 %v306
  %v1087 = vunpack.c.l.b16 %v307
  %v1088 = vunpack.c.h.b16 %v307
  %v1089 = vunpack.c.l.b16 %v308
  %v1090 = vunpack.c.h.b16 %v308
  %v1091 = vunpack.c.l.b16 %v309
  %v1092 = vunpack.c.h.b16 %v309
  %v1093 = vunpack.c.l.b16 %v310
  %v1094 = vunpack.c.h.b16 %v310
  %v1095 = vunpack.c.l.b16 %v311
  %v1096 = vunpack.c.h.b16 %v311
  %v1097 = vunpack.c.l.b16 %v312
  %v1098 = vunpack.c.h.b16 %v312
  %v1099 = vunpack.c.l.b16 %v313
  %v1100 = vunpack.c.h.b16 %v313
  %v1101 = vunpack.c.l.b16 %v314
  %v1102 = vunpack.c.h.b16 %v314
  %v1103 = vunpack.c.l.b16 %v315
  %v1104 = vunpack.c.h.b16 %v315
  %v1105 = vunpack.c.l.b16 %v316
  %v1106 = vunpack.c.h.b16 %v316
  %v1107 = vpack.c.b16 %v599, %v595
  %v1108 = vpack.c.b16 %v600, %v596
  %v1109 = vpack.c.b16 %v601, %v597
  %v1110 = vpack.c.b16 %v602, %v598
  %v1111 = vpack.c.b16 %v607, %v603
  %v1112 = vpack.c.b16 %v608, %v604
  %v1113 = vpack.c.b16 %v609, %v605
  %v1114 = vpack.c.b16 %v610, %v606
  %v1115 = vpack.c.b16 %v615, %v611
  %v1116 = vpack.c.b16 %v616, %v612
  %v1117 = vpack.c.b16 %v617, %v613
  %v1118 = vpack.c.b16 %v618, %v614
  %v1119 = vpack.c.b16 %v623, %v619
  %v1120 = vpack.c.b16 %v624, %v620
  %v1121 = vpack.c.b16 %v625, %v621
  %v1122 = vpack.c.b16 %v626, %v622
  %v1123 = vpack.c.b16 %v631, %v627
  %v1124 = vpack.c.b16 %v632, %v628
  %v1125 = vpack.c.b16 %v633, %v629
  %v1126 = vpack.c.b16 %v634, %v630
  %v1127 = vpack.c.b16 %v639, %v635
  %v1128 = vpack.c.b16 %v640, %v636
  %v1129 = vpack.c.b16 %v641, %v637
  %v1130 = vpack.c.b16 %v642, %v638
  %v1131 = vpack.c.b16 %v647, %v643
  %v1132 = vpack.c.b16 %v648, %v644
  %v1133 = vpack.c.b16 %v649, %v645
  %v1134 = vpack.c.b16 %v650, %v646
  %v1135 = vpack.c.b16 %v655, %v651
  %v1136 = vpack.c.b16 %v656, %v652
  %v1137 = vpack.c.b16 %v657, %v653
  %v1138 = vpack.c.b16 %v658, %v654
  %v1139 = vpack.c.b16 %v663, %v659
  %v1140 = vpack.c.b16 %v664, %v660
  %v1141 = vpack.c.b16 %v665, %v661
  %v1142 = vpack.c.b16 %v666, %v662
  %v1143 = vpack.c.b16 %v671, %v667
  %v1144 = vpack.c.b16 %v672, %v668
  %v1145 = vpack.c.b16 %v673, %v669
  %v1146 = vpack.c.b16 %v674, %v670
  %v1147 = vpack.c.b16 %v679, %v675
  %v1148 = vpack.c.b16 %v680, %v676
  %v1149 = vpack.c.b16 %v681, %v677
  %v1150 = vpack.c.b16 %v682, %v678
  %v1151 = vpack.c.b16 %v687, %v683
  %v1152 = vpack.c.b16 %v688, %v684
  %v1153 = vpack.c.b16 %v689, %v685
  %v1154 = vpack.c.b16 %v690, %v686
  %v1155 = vpack.c.b16 %v695, %v691
  %v1156 = vpack.c.b16 %v696, %v692
  %v1157 = vpack.c.b16 %v697, %v693
  %v1158 = vpack.c.b16 %v698, %v694
  %v1159 = vpack.c.b16 %v703, %v699
  %v1160 = vpack.c.b16 %v704, %v700
  %v1161 = vpack.c.b16 %v705, %v701
  %v1162 = vpack.c.b16 %v706, %v702
  %v1163 = vpack.c.b16 %v711, %v707
  %v1164 = vpack.c.b16 %v712, %v708
  %v1165 = vpack.c.b16 %v713, %v709
  %v1166 = vpack.c.b16 %v714, %v710
  %v1167 = vpack.c.b16 %v719, %v715
  %v1168 = vpack.c.b16 %v720, %v716
  %v1169 = vpack.c.b16 %v721, %v717
  %v1170 = vpack.c.b16 %v722, %v718
  %v1171 = vpack.c.b16 %v727, %v723
  %v1172 = vpack.c.b16 %v728, %v724
  %v1173 = vpack.c.b16 %v729, %v725
  %v1174 = vpack.c.b16 %v730, %v726
  %v1175 = vpack.c.b16 %v735, %v731
  %v1176 = vpack.c.b16 %v736, %v732
  %v1177 = vpack.c.b16 %v737, %v733
  %v1178 = vpack.c.b16 %v738, %v734
  %v1179 = vpack.c.b16 %v743, %v739
  %v1180 = vpack.c.b16 %v744, %v740
  %v1181 = vpack.c.b16 %v745, %v741
  %v1182 = vpack.c.b16 %v746, %v742
  %v1183 = vpack.c.b16 %v751, %v747
  %v1184 = vpack.c.b16 %v752, %v748
  %v1185 = vpack.c.b16 %v753, %v749
  %v1186 = vpack.c.b16 %v754, %v750
  %v1187 = vpack.c.b16 %v759, %v755
  %v1188 = vpack.c.b16 %v760, %v756
  %v1189 = vpack.c.b16 %v761, %v757
  %v1190 = vpack.c.b16 %v762, %v758
  %v1191 = vpack.c.b16 %v767, %v763
  %v1192 = vpack.c.b16 %v768, %v764
  %v1193 = vpack.c.b16 %v769, %v765
  %v1194 = vpack.c.b16 %v770, %v766
  %v1195 = vpack.c.b16 %v775, %v771
  %v1196 = vpack.c.b16 %v776, %v772
  %v1197 = vpack.c.b16 %v777, %v773
  %v1198 = vpack.c.b16 %v778, %v774
  %v1199 = vpack.c.b16 %v783, %v779
  %v1200 = vpack.c.b16 %v784, %v780
  %v1201 = vpack.c.b16 %v785, %v781
  %v1202 = vpack.c.b16 %v786, %v782
  %v1203 = vpack.c.b16 %v791, %v787
  %v1204 = vpack.c.b16 %v792, %v788
  %v1205 = vpack.c.b16 %v793, %v789
  %v1206 = vpack.c.b16 %v794, %v790
  %v1207 = vpack.c.b16 %v799, %v795
  %v1208 = vpack.c.b16 %v800, %v796
  %v1209 = vpack.c.b16 %v801, %v797
  %v1210 = vpack.c.b16 %v802, %v798
  %v1211 = vpack.c.b16 %v807, %v803
  %v1212 = vpack.c.b16 %v808, %v804
  %v1213 = vpack.c.b16 %v809, %v805
  %v1214 = vpack.c.b16 %v810, %v806
  %v1215 = vpack.c.b16 %v815, %v811
  %v1216 = vpack.c.b16 %v816, %v812
  %v1217 = vpack.c.b16 %v817, %v813
  %v1218 = vpack.c.b16 %v818, %v814
  %v1219 = vpack.c.b16 %v823, %v819
  %v1220 = vpack.c.b16 %v824, %v820
  %v1221 = vpack.c.b16 %v825, %v821
  %v1222 = vpack.c.b16 %v826, %v822
  %v1223 = vpack.c.b16 %v831, %v827
  %v1224 = vpack.c.b16 %v832, %v828
  %v1225 = vpack.c.b16 %v833, %v829
  %v1226 = vpack.c.b16 %v834, %v830
  %v1227 = vpack.c.b16 %v839, %v835
  %v1228 = vpack.c.b16 %v840, %v836
  %v1229 = vpack.c.b16 %v841, %v837
  %v1230 = vpack.c.b16 %v842, %v838
  %v1231 = vpack.c.b16 %v847, %v843
  %v1232 = vpack.c.b16 %v848, %v844
  %v1233 = vpack.c.b16 %v849, %v845
  %v1234 = vpack.c.b16 %v850, %v846
  %v1235 = vpack.c.b16 %v855, %v851
  %v1236 = vpack.c.b16 %v856, %v852
  %v1237 = vpack.c.b16 %v857, %v853
  %v1238 = vpack.c.b16 %v858, %v854
  %v1239 = vpack.c.b16 %v863, %v859
  %v1240 = vpack.c.b16 %v864, %v860
  %v1241 = vpack.c.b16 %v865, %v861
  %v1242 = vpack.c.b16 %v866, %v862
  %v1243 = vpack.c.b16 %v871, %v867
  %v1244 = vpack.c.b16 %v872, %v868
  %v1245 = vpack.c.b16 %v873, %v869
  %v1246 = vpack.c.b16 %v874, %v870
  %v1247 = vpack.c.b16 %v879, %v875
  %v1248 = vpack.c.b16 %v880, %v876
  %v1249 = vpack.c.b16 %v881, %v877
  %v1250 = vpack.c.b16 %v882, %v878
  %v1251 = vpack.c.b16 %v887, %v883
  %v1252 = vpack.c.b16 %v888, %v884
  %v1253 = vpack.c.b16 %v889, %v885
  %v1254 = vpack.c.b16 %v890, %v886
  %v1255 = vpack.c.b16 %v895, %v891
  %v1256 = vpack.c.b16 %v896, %v892
  %v1257 = vpack.c.b16 %v897, %v893
  %v1258 = vpack.c.b16 %v898, %v894
  %v1259 = vpack.c.b16 %v903, %v899
  %v1260 = vpack.c.b16 %v904, %v900
  %v1261 = vpack.c.b16 %v905, %v901
  %v1262 = vpack.c.b16 %v906, %v902
  %v1263 = vpack.c.b16 %v911, %v907
  %v1264 = vpack.c.b16 %v912, %v908
  %v1265 = vpack.c.b16 %v913, %v909
  %v1266 = vpack.c.b16 %v914, %v910
  %v1267 = vpack.c.b16 %v919, %v915
  %v1268 = vpack.c.b16 %v920, %v916
  %v1269 = vpack.c.b16 %v921, %v917
  %v1270 = vpack.c.b16 %v922, %v918
  %v1271 = vpack.c.b16 %v927, %v923
  %v1272 = vpack.c.b16 %v928, %v924
  %v1273 = vpack.c.b16 %v929, %v925
  %v1274 = vpack.c.b16 %v930, %v926
  %v1275 = vpack.c.b16 %v935, %v931
  %v1276 = vpack.c.b16 %v936, %v932
  %v1277 = vpack.c.b16 %v937, %v933
  %v1278 = vpack.c.b16 %v938, %v934
  %v1279 = vpack.c.b16 %v943, %v939
  %v1280 = vpack.c.b16 %v944, %v940
  %v1281 = vpack.c.b16 %v945, %v941
  %v1282 = vpack.c.b16 %v946, %v942
  %v1283 = vpack.c.b16 %v951, %v947
  %v1284 = vpack.c.b16 %v952, %v948
  %v1285 = vpack.c.b16 %v953, %v949
  %v1286 = vpack.c.b16 %v954, %v950
  %v1287 = vpack.c.b16 %v959, %v955
  %v1288 = vpack.c.b16 %v960, %v956
  %v1289 = vpack.c.b16 %v961, %v957
  %v1290 = vpack.c.b16 %v962, %v958
  %v1291 = vpack.c.b16 %v967, %v963
  %v1292 = vpack.c.b16 %v968, %v964
  %v1293 = vpack.c.b16 %v969, %v965
  %v1294 = vpack.c.b16 %v970, %v966
  %v1295 = vpack.c.b16 %v975, %v971
  %v1296 = vpack.c.b16 %v976, %v972
  %v1297 = vpack.c.b16 %v977, %v973
  %v1298 = vpack.c.b16 %v978, %v974
  %v1299 = vpack.c.b16 %v983, %v979
  %v1300 = vpack.c.b16 %v984, %v980
  %v1301 = vpack.c.b16 %v985, %v981
  %v1302 = vpack.c.b16 %v986, %v982
  %v1303 = vpack.c.b16 %v991, %v987
  %v1304 = vpack.c.b16 %v992, %v988
  %v1305 = vpack.c.b16 %v993, %v989
  %v1306 = vpack.c.b16 %v994, %v990
  %v1307 = vpack.c.b16 %v999, %v995
  %v1308 = vpack.c.b16 %v1000, %v996
  %v1309 = vpack.c.b16 %v1001, %v997
  %v1310 = vpack.c.b16 %v1002, %v998
  %v1311 = vpack.c.b16 %v1007, %v1003
  %v1312 = vpack.c.b16 %v1008, %v1004
  %v1313 = vpack.c.b16 %v1009, %v1005
  %v1314 = vpack.c.b16 %v1010, %v1006
  %v1315 = vpack.c.b16 %v1015, %v1011
  %v1316 = vpack.c.b16 %v1016, %v1012
  %v1317 = vpack.c.b16 %v1017, %v1013
  %v1318 = vpack.c.b16 %v1018, %v1014
  %v1319 = vpack.c.b16 %v1023, %v1019
  %v1320 = vpack.c.b16 %v1024, %v1020
  %v1321 = vpack.c.b16 %v1025, %v1021
  %v1322 = vpack.c.b16 %v1026, %v1022
  %v1323 = vpack.c.b16 %v1031, %v1027
  %v1324 = vpack.c.b16 %v1032, %v1028
  %v1325 = vpack.c.b16 %v1033, %v1029
  %v1326 = vpack.c.b16 %v1034, %v1030
  %v1327 = vpack.c.b16 %v1039, %v1035
  %v1328 = vpack.c.b16 %v1040, %v1036
  %v1329 = vpack.c.b16 %v1041, %v1037
  %v1330 = vpack.c.b16 %v1042, %v1038
  %v1331 = vpack.c.b16 %v1047, %v1043
  %v1332 = vpack.c.b16 %v1048, %v1044
  %v1333 = vpack.c.b16 %v1049, %v1045
  %v1334 = vpack.c.b16 %v1050, %v1046
  %v1335 = vpack.c.b16 %v1055, %v1051
  %v1336 = vpack.c.b16 %v1056, %v1052
  %v1337 = vpack.c.b16 %v1057, %v1053
  %v1338 = vpack.c.b16 %v1058, %v1054
  %v1339 = vpack.c.b16 %v1063, %v1059
  %v1340 = vpack.c.b16 %v1064, %v1060
  %v1341 = vpack.c.b16 %v1065, %v1061
  %v1342 = vpack.c.b16 %v1066, %v1062
  %v1343 = vpack.c.b16 %v1071, %v1067
  %v1344 = vpack.c.b16 %v1072, %v1068
  %v1345 = vpack.c.b16 %v1073, %v1069
  %v1346 = vpack.c.b16 %v1074, %v1070
  %v1347 = vpack.c.b16 %v1079, %v1075
  %v1348 = vpack.c.b16 %v1080, %v1076
  %v1349 = vpack.c.b16 %v1081, %v1077
  %v1350 = vpack.c.b16 %v1082, %v1078
  %v1351 = vpack.c.b16 %v1087, %v1083
  %v1352 = vpack.c.b16 %v1088, %v1084
  %v1353 = vpack.c.b16 %v1089, %v1085
  %v1354 = vpack.c.b16 %v1090, %v1086
  %v1355 = vpack.c.b16 %v1095, %v1091
  %v1356 = vpack.c.b16 %v1096, %v1092
  %v1357 = vpack.c.b16 %v1097, %v1093
  %v1358 = vpack.c.b16 %v1098, %v1094
  %v1359 = vpack.c.b16 %v1103, %v1099
  %v1360 = vpack.c.b16 %v1104, %v1100
  %v1361 = vpack.c.b16 %v1105, %v1101
  %v1362 = vpack.c.b16 %v1106, %v1102
  %1619 = vmatprep.subr.bf16.mxu0 %v1136
  %1620 = vmatpush1.bf16.msra.mxu0 %v1135
  %1621 = vmatprep.subr.bf16.mxu0 %v1132
  %1622 = vmatpush1.bf16.msra.mxu0 %v1131
  %1623 = vmatprep.subr.bf16.mxu0 %v1128
  %1624 = vmatpush1.bf16.msra.mxu0 %v1127
  %1625 = vmatprep.subr.bf16.mxu0 %v1124
  %1626 = vmatpush1.bf16.msra.mxu0 %v1123
  %1627 = vmatprep.subr.bf16.mxu0 %v1120
  %1628 = vmatpush1.bf16.msra.mxu0 %v1119
  %1629 = vmatprep.subr.bf16.mxu0 %v1116
  %1630 = vmatpush1.bf16.msra.mxu0 %v1115
  %1631 = vmatprep.subr.bf16.mxu0 %v1112
  %1632 = vmatpush1.bf16.msra.mxu0 %v1111
  %1633 = vmatprep.subr.bf16.mxu0 %v1108
  %1634 = vmatpush1.bf16.msra.mxu0 %v1107
  %1635 = vmatprep.subr.bf16.mxu0 %v1168
  %1636 = vmatpush2.bf16.msra.mxu0 %v1167
  %1637 = vmatprep.subr.bf16.mxu0 %v1164
  %1638 = vmatpush2.bf16.msra.mxu0 %v1163
  %1639 = vmatprep.subr.bf16.mxu0 %v1160
  %1640 = vmatpush2.bf16.msra.mxu0 %v1159
  %1641 = vmatprep.subr.bf16.mxu0 %v1156
  %1642 = vmatpush2.bf16.msra.mxu0 %v1155
  %1643 = vmatprep.subr.bf16.mxu0 %v1152
  %1644 = vmatpush2.bf16.msra.mxu0 %v1151
  %1645 = vmatprep.subr.bf16.mxu0 %v1148
  %1646 = vmatpush2.bf16.msra.mxu0 %v1147
  %1647 = vmatprep.subr.bf16.mxu0 %v1144
  %1648 = vmatpush2.bf16.msra.mxu0 %v1143
  %1649 = vmatprep.subr.bf16.mxu0 %v1140
  %1650 = vmatpush2.bf16.msra.mxu0 %v1139
  %1651 = vmatprep.mubr.bf16.mxu0 %v54
  %1652 = vmatmul.mubr.bf16.gmra.mxu0 %v53
  %v1653 = vpop.f32.mrf.mxu0
  %v1654 = vadd.f32 %v322, %v1653
  %v1655 = vpop.f32.mrf.mxu0
  %v1656 = vadd.f32 %v326, %v1655
  %v1657 = vpop.f32.mrf.mxu0
  %v1658 = vpop.f32.mrf.mxu0
  %1659 = vdwg.mxu0
  %1660 = vmatprep.subr.bf16.mxu0 %v1200
  %1661 = vmatpush1.bf16.msra.mxu0 %v1199
  %1662 = vmatprep.subr.bf16.mxu0 %v1196
  %1663 = vmatpush1.bf16.msra.mxu0 %v1195
  %1664 = vmatprep.subr.bf16.mxu0 %v1192
  %1665 = vmatpush1.bf16.msra.mxu0 %v1191
  %1666 = vmatprep.subr.bf16.mxu0 %v1188
  %1667 = vmatpush1.bf16.msra.mxu0 %v1187
  %1668 = vmatprep.subr.bf16.mxu0 %v1184
  %1669 = vmatpush1.bf16.msra.mxu0 %v1183
  %1670 = vmatprep.subr.bf16.mxu0 %v1180
  %1671 = vmatpush1.bf16.msra.mxu0 %v1179
  %1672 = vmatprep.subr.bf16.mxu0 %v1176
  %1673 = vmatpush1.bf16.msra.mxu0 %v1175
  %1674 = vmatprep.subr.bf16.mxu0 %v1172
  %1675 = vmatpush1.bf16.msra.mxu0 %v1171
  %1676 = vmatprep.subr.bf16.mxu0 %v1232
  %1677 = vmatpush2.bf16.msra.mxu0 %v1231
  %1678 = vmatprep.subr.bf16.mxu0 %v1228
  %1679 = vmatpush2.bf16.msra.mxu0 %v1227
  %1680 = vmatprep.subr.bf16.mxu0 %v1224
  %1681 = vmatpush2.bf16.msra.mxu0 %v1223
  %1682 = vmatprep.subr.bf16.mxu0 %v1220
  %1683 = vmatpush2.bf16.msra.mxu0 %v1219
  %1684 = vmatprep.subr.bf16.mxu0 %v1216
  %1685 = vmatpush2.bf16.msra.mxu0 %v1215
  %1686 = vmatprep.subr.bf16.mxu0 %v1212
  %1687 = vmatpush2.bf16.msra.mxu0 %v1211
  %1688 = vmatprep.subr.bf16.mxu0 %v1208
  %1689 = vmatpush2.bf16.msra.mxu0 %v1207
  %1690 = vmatprep.subr.bf16.mxu0 %v1204
  %1691 = vmatpush2.bf16.msra.mxu0 %v1203
  %1692 = vmatprep.mubr.bf16.mxu0 %v56
  %1693 = vmatmul.mubr.bf16.gmra.mxu0 %v55
  %v1694 = vpop.f32.mrf.mxu0
  %v1695 = vadd.f32 %v1654, %v1694
  %v1696 = vpop.f32.mrf.mxu0
  %v1697 = vadd.f32 %v1656, %v1696
  %v1698 = vpop.f32.mrf.mxu0
  %v1699 = vpop.f32.mrf.mxu0
  %1700 = vdwg.mxu0
  %1701 = vmatprep.subr.bf16.mxu0 %v1264
  %1702 = vmatpush1.bf16.msra.mxu0 %v1263
  %1703 = vmatprep.subr.bf16.mxu0 %v1260
  %1704 = vmatpush1.bf16.msra.mxu0 %v1259
  %1705 = vmatprep.subr.bf16.mxu0 %v1256
  %1706 = vmatpush1.bf16.msra.mxu0 %v1255
  %1707 = vmatprep.subr.bf16.mxu0 %v1252
  %1708 = vmatpush1.bf16.msra.mxu0 %v1251
  %1709 = vmatprep.subr.bf16.mxu0 %v1248
  %1710 = vmatpush1.bf16.msra.mxu0 %v1247
  %1711 = vmatprep.subr.bf16.mxu0 %v1244
  %1712 = vmatpush1.bf16.msra.mxu0 %v1243
  %1713 = vmatprep.subr.bf16.mxu0 %v1240
  %1714 = vmatpush1.bf16.msra.mxu0 %v1239
  %1715 = vmatprep.subr.bf16.mxu0 %v1236
  %1716 = vmatpush1.bf16.msra.mxu0 %v1235
  %1717 = vmatprep.subr.bf16.mxu0 %v1296
  %1718 = vmatpush2.bf16.msra.mxu0 %v1295
  %1719 = vmatprep.subr.bf16.mxu0 %v1292
  %1720 = vmatpush2.bf16.msra.mxu0 %v1291
  %1721 = vmatprep.subr.bf16.mxu0 %v1288
  %1722 = vmatpush2.bf16.msra.mxu0 %v1287
  %1723 = vmatprep.subr.bf16.mxu0 %v1284
  %1724 = vmatpush2.bf16.msra.mxu0 %v1283
  %1725 = vmatprep.subr.bf16.mxu0 %v1280
  %1726 = vmatpush2.bf16.msra.mxu0 %v1279
  %1727 = vmatprep.subr.bf16.mxu0 %v1276
  %1728 = vmatpush2.bf16.msra.mxu0 %v1275
  %1729 = vmatprep.subr.bf16.mxu0 %v1272
  %1730 = vmatpush2.bf16.msra.mxu0 %v1271
  %1731 = vmatprep.subr.bf16.mxu0 %v1268
  %1732 = vmatpush2.bf16.msra.mxu0 %v1267
  %1733 = vmatprep.mubr.bf16.mxu0 %v58
  %1734 = vmatmul.mubr.bf16.gmra.mxu0 %v57
  %v1735 = vpop.f32.mrf.mxu0
  %v1736 = vadd.f32 %v1695, %v1735
  %v1737 = vpop.f32.mrf.mxu0
  %v1738 = vadd.f32 %v1697, %v1737
  %v1739 = vpop.f32.mrf.mxu0
  %v1740 = vpop.f32.mrf.mxu0
  %1741 = vdwg.mxu0
  %1742 = vmatprep.subr.bf16.mxu0 %v1328
  %1743 = vmatpush1.bf16.msra.mxu0 %v1327
  %1744 = vmatprep.subr.bf16.mxu0 %v1324
  %1745 = vmatpush1.bf16.msra.mxu0 %v1323
  %1746 = vmatprep.subr.bf16.mxu0 %v1320
  %1747 = vmatpush1.bf16.msra.mxu0 %v1319
  %1748 = vmatprep.subr.bf16.mxu0 %v1316
  %1749 = vmatpush1.bf16.msra.mxu0 %v1315
  %1750 = vmatprep.subr.bf16.mxu0 %v1312
  %1751 = vmatpush1.bf16.msra.mxu0 %v1311
  %1752 = vmatprep.subr.bf16.mxu0 %v1308
  %1753 = vmatpush1.bf16.msra.mxu0 %v1307
  %1754 = vmatprep.subr.bf16.mxu0 %v1304
  %1755 = vmatpush1.bf16.msra.mxu0 %v1303
  %1756 = vmatprep.subr.bf16.mxu0 %v1300
  %1757 = vmatpush1.bf16.msra.mxu0 %v1299
  %1758 = vmatprep.subr.bf16.mxu0 %v1360
  %1759 = vmatpush2.bf16.msra.mxu0 %v1359
  %1760 = vmatprep.subr.bf16.mxu0 %v1356
  %1761 = vmatpush2.bf16.msra.mxu0 %v1355
  %1762 = vmatprep.subr.bf16.mxu0 %v1352
  %1763 = vmatpush2.bf16.msra.mxu0 %v1351
  %1764 = vmatprep.subr.bf16.mxu0 %v1348
  %1765 = vmatpush2.bf16.msra.mxu0 %v1347
  %1766 = vmatprep.subr.bf16.mxu0 %v1344
  %1767 = vmatpush2.bf16.msra.mxu0 %v1343
  %1768 = vmatprep.subr.bf16.mxu0 %v1340
  %1769 = vmatpush2.bf16.msra.mxu0 %v1339
  %1770 = vmatprep.subr.bf16.mxu0 %v1336
  %1771 = vmatpush2.bf16.msra.mxu0 %v1335
  %1772 = vmatprep.subr.bf16.mxu0 %v1332
  %1773 = vmatpush2.bf16.msra.mxu0 %v1331
  %1774 = vmatprep.mubr.bf16.mxu0 %v60
  %1775 = vmatmul.mubr.bf16.gmra.mxu0 %v59
  %v1776 = vpop.f32.mrf.mxu0
  %v1777 = vadd.f32 %v1736, %v1776
  %v1778 = vpop.f32.mrf.mxu0
  %v1779 = vadd.f32 %v1738, %v1778
  %v1780 = vpop.f32.mrf.mxu0
  %v1781 = vpop.f32.mrf.mxu0
  %1782 = vdwg.mxu0
  %1783 = vmatprep.subr.bf16.mxu0 %v1138
  %1784 = vmatpush1.bf16.msra.mxu0 %v1137
  %1785 = vmatprep.subr.bf16.mxu0 %v1134
  %1786 = vmatpush1.bf16.msra.mxu0 %v1133
  %1787 = vmatprep.subr.bf16.mxu0 %v1130
  %1788 = vmatpush1.bf16.msra.mxu0 %v1129
  %1789 = vmatprep.subr.bf16.mxu0 %v1126
  %1790 = vmatpush1.bf16.msra.mxu0 %v1125
  %1791 = vmatprep.subr.bf16.mxu0 %v1122
  %1792 = vmatpush1.bf16.msra.mxu0 %v1121
  %1793 = vmatprep.subr.bf16.mxu0 %v1118
  %1794 = vmatpush1.bf16.msra.mxu0 %v1117
  %1795 = vmatprep.subr.bf16.mxu0 %v1114
  %1796 = vmatpush1.bf16.msra.mxu0 %v1113
  %1797 = vmatprep.subr.bf16.mxu0 %v1110
  %1798 = vmatpush1.bf16.msra.mxu0 %v1109
  %1799 = vmatprep.subr.bf16.mxu0 %v1170
  %1800 = vmatpush2.bf16.msra.mxu0 %v1169
  %1801 = vmatprep.subr.bf16.mxu0 %v1166
  %1802 = vmatpush2.bf16.msra.mxu0 %v1165
  %1803 = vmatprep.subr.bf16.mxu0 %v1162
  %1804 = vmatpush2.bf16.msra.mxu0 %v1161
  %1805 = vmatprep.subr.bf16.mxu0 %v1158
  %1806 = vmatpush2.bf16.msra.mxu0 %v1157
  %1807 = vmatprep.subr.bf16.mxu0 %v1154
  %1808 = vmatpush2.bf16.msra.mxu0 %v1153
  %1809 = vmatprep.subr.bf16.mxu0 %v1150
  %1810 = vmatpush2.bf16.msra.mxu0 %v1149
  %1811 = vmatprep.subr.bf16.mxu0 %v1146
  %1812 = vmatpush2.bf16.msra.mxu0 %v1145
  %1813 = vmatprep.subr.bf16.mxu0 %v1142
  %1814 = vmatpush2.bf16.msra.mxu0 %v1141
  %1815 = vmatprep.mubr.bf16.mxu0 %v54
  %1816 = vmatmul.mubr.bf16.gmra.mxu0 %v53
  %v1817 = vpop.f32.mrf.mxu0
  %v1818 = vadd.f32 %v330, %v1817
  %v1819 = vpop.f32.mrf.mxu0
  %v1820 = vadd.f32 %v334, %v1819
  %v1821 = vpop.f32.mrf.mxu0
  %v1822 = vpop.f32.mrf.mxu0
  %1823 = vdwg.mxu0
  %1824 = vmatprep.subr.bf16.mxu0 %v1202
  %1825 = vmatpush1.bf16.msra.mxu0 %v1201
  %1826 = vmatprep.subr.bf16.mxu0 %v1198
  %1827 = vmatpush1.bf16.msra.mxu0 %v1197
  %1828 = vmatprep.subr.bf16.mxu0 %v1194
  %1829 = vmatpush1.bf16.msra.mxu0 %v1193
  %1830 = vmatprep.subr.bf16.mxu0 %v1190
  %1831 = vmatpush1.bf16.msra.mxu0 %v1189
  %1832 = vmatprep.subr.bf16.mxu0 %v1186
  %1833 = vmatpush1.bf16.msra.mxu0 %v1185
  %1834 = vmatprep.subr.bf16.mxu0 %v1182
  %1835 = vmatpush1.bf16.msra.mxu0 %v1181
  %1836 = vmatprep.subr.bf16.mxu0 %v1178
  %1837 = vmatpush1.bf16.msra.mxu0 %v1177
  %1838 = vmatprep.subr.bf16.mxu0 %v1174
  %1839 = vmatpush1.bf16.msra.mxu0 %v1173
  %1840 = vmatprep.subr.bf16.mxu0 %v1234
  %1841 = vmatpush2.bf16.msra.mxu0 %v1233
  %1842 = vmatprep.subr.bf16.mxu0 %v1230
  %1843 = vmatpush2.bf16.msra.mxu0 %v1229
  %1844 = vmatprep.subr.bf16.mxu0 %v1226
  %1845 = vmatpush2.bf16.msra.mxu0 %v1225
  %1846 = vmatprep.subr.bf16.mxu0 %v1222
  %1847 = vmatpush2.bf16.msra.mxu0 %v1221
  %1848 = vmatprep.subr.bf16.mxu0 %v1218
  %1849 = vmatpush2.bf16.msra.mxu0 %v1217
  %1850 = vmatprep.subr.bf16.mxu0 %v1214
  %1851 = vmatpush2.bf16.msra.mxu0 %v1213
  %1852 = vmatprep.subr.bf16.mxu0 %v1210
  %1853 = vmatpush2.bf16.msra.mxu0 %v1209
  %1854 = vmatprep.subr.bf16.mxu0 %v1206
  %1855 = vmatpush2.bf16.msra.mxu0 %v1205
  %1856 = vmatprep.mubr.bf16.mxu0 %v56
  %1857 = vmatmul.mubr.bf16.gmra.mxu0 %v55
  %v1858 = vpop.f32.mrf.mxu0
  %v1859 = vadd.f32 %v1818, %v1858
  %v1860 = vpop.f32.mrf.mxu0
  %v1861 = vadd.f32 %v1820, %v1860
  %v1862 = vpop.f32.mrf.mxu0
  %v1863 = vpop.f32.mrf.mxu0
  %1864 = vdwg.mxu0
  %1865 = vmatprep.subr.bf16.mxu0 %v1266
  %1866 = vmatpush1.bf16.msra.mxu0 %v1265
  %1867 = vmatprep.subr.bf16.mxu0 %v1262
  %1868 = vmatpush1.bf16.msra.mxu0 %v1261
  %1869 = vmatprep.subr.bf16.mxu0 %v1258
  %1870 = vmatpush1.bf16.msra.mxu0 %v1257
  %1871 = vmatprep.subr.bf16.mxu0 %v1254
  %1872 = vmatpush1.bf16.msra.mxu0 %v1253
  %1873 = vmatprep.subr.bf16.mxu0 %v1250
  %1874 = vmatpush1.bf16.msra.mxu0 %v1249
  %1875 = vmatprep.subr.bf16.mxu0 %v1246
  %1876 = vmatpush1.bf16.msra.mxu0 %v1245
  %1877 = vmatprep.subr.bf16.mxu0 %v1242
  %1878 = vmatpush1.bf16.msra.mxu0 %v1241
  %1879 = vmatprep.subr.bf16.mxu0 %v1238
  %1880 = vmatpush1.bf16.msra.mxu0 %v1237
  %1881 = vmatprep.subr.bf16.mxu0 %v1298
  %1882 = vmatpush2.bf16.msra.mxu0 %v1297
  %1883 = vmatprep.subr.bf16.mxu0 %v1294
  %1884 = vmatpush2.bf16.msra.mxu0 %v1293
  %1885 = vmatprep.subr.bf16.mxu0 %v1290
  %1886 = vmatpush2.bf16.msra.mxu0 %v1289
  %1887 = vmatprep.subr.bf16.mxu0 %v1286
  %1888 = vmatpush2.bf16.msra.mxu0 %v1285
  %1889 = vmatprep.subr.bf16.mxu0 %v1282
  %1890 = vmatpush2.bf16.msra.mxu0 %v1281
  %1891 = vmatprep.subr.bf16.mxu0 %v1278
  %1892 = vmatpush2.bf16.msra.mxu0 %v1277
  %1893 = vmatprep.subr.bf16.mxu0 %v1274
  %1894 = vmatpush2.bf16.msra.mxu0 %v1273
  %1895 = vmatprep.subr.bf16.mxu0 %v1270
  %1896 = vmatpush2.bf16.msra.mxu0 %v1269
  %1897 = vmatprep.mubr.bf16.mxu0 %v58
  %1898 = vmatmul.mubr.bf16.gmra.mxu0 %v57
  %v1899 = vpop.f32.mrf.mxu0
  %v1900 = vadd.f32 %v1859, %v1899
  %v1901 = vpop.f32.mrf.mxu0
  %v1902 = vadd.f32 %v1861, %v1901
  %v1903 = vpop.f32.mrf.mxu0
  %v1904 = vpop.f32.mrf.mxu0
  %1905 = vdwg.mxu0
  %1906 = vmatprep.subr.bf16.mxu0 %v1330
  %1907 = vmatpush1.bf16.msra.mxu0 %v1329
  %1908 = vmatprep.subr.bf16.mxu0 %v1326
  %1909 = vmatpush1.bf16.msra.mxu0 %v1325
  %1910 = vmatprep.subr.bf16.mxu0 %v1322
  %1911 = vmatpush1.bf16.msra.mxu0 %v1321
  %1912 = vmatprep.subr.bf16.mxu0 %v1318
  %1913 = vmatpush1.bf16.msra.mxu0 %v1317
  %1914 = vmatprep.subr.bf16.mxu0 %v1314
  %1915 = vmatpush1.bf16.msra.mxu0 %v1313
  %1916 = vmatprep.subr.bf16.mxu0 %v1310
  %1917 = vmatpush1.bf16.msra.mxu0 %v1309
  %1918 = vmatprep.subr.bf16.mxu0 %v1306
  %1919 = vmatpush1.bf16.msra.mxu0 %v1305
  %1920 = vmatprep.subr.bf16.mxu0 %v1302
  %1921 = vmatpush1.bf16.msra.mxu0 %v1301
  %1922 = vmatprep.subr.bf16.mxu0 %v1362
  %1923 = vmatpush2.bf16.msra.mxu0 %v1361
  %1924 = vmatprep.subr.bf16.mxu0 %v1358
  %1925 = vmatpush2.bf16.msra.mxu0 %v1357
  %1926 = vmatprep.subr.bf16.mxu0 %v1354
  %1927 = vmatpush2.bf16.msra.mxu0 %v1353
  %1928 = vmatprep.subr.bf16.mxu0 %v1350
  %1929 = vmatpush2.bf16.msra.mxu0 %v1349
  %1930 = vmatprep.subr.bf16.mxu0 %v1346
  %1931 = vmatpush2.bf16.msra.mxu0 %v1345
  %1932 = vmatprep.subr.bf16.mxu0 %v1342
  %1933 = vmatpush2.bf16.msra.mxu0 %v1341
  %1934 = vmatprep.subr.bf16.mxu0 %v1338
  %1935 = vmatpush2.bf16.msra.mxu0 %v1337
  %1936 = vmatprep.subr.bf16.mxu0 %v1334
  %1937 = vmatpush2.bf16.msra.mxu0 %v1333
  %1938 = vmatprep.mubr.bf16.mxu0 %v60
  %1939 = vmatmul.mubr.bf16.gmra.mxu0 %v59
  %v1940 = vpop.f32.mrf.mxu0
  %v1941 = vadd.f32 %v1900, %v1940
  %v1942 = vpop.f32.mrf.mxu0
  %v1943 = vadd.f32 %v1902, %v1942
  %v1944 = vpop.f32.mrf.mxu0
  %v1945 = vpop.f32.mrf.mxu0
  %1946 = vdwg.mxu0
  %v1947 = vmax.f32 %v1777, 0.0
  %v1948 = vmax.f32 %v1779, 0.0
  %v1949 = vmax.f32 %v1941, 0.0
  %v1950 = vmax.f32 %v1943, 0.0
  %v1951 = vpack.c.bf16 %v1947, %v1947
  %v1952 = vpack.c.bf16 %v1948, %v1948
  %v1953 = vpack.c.bf16 %v1949, %v1949
  %v1954 = vpack.c.bf16 %v1950, %v1950
  %v1955 = vld [vmem:[%s3] sm:$0xff]
  %v1956 = vld [vmem:[%s3 + $0x8] sm:$0xff]
  %v1957 = vld [vmem:[%s3 + $0x10] sm:$0xff]
  %v1958 = vld [vmem:[%s3 + $0x18] sm:$0xff]
  %v1959 = vld [vmem:[%s3 + $0x20] sm:$0xff]
  %v1960 = vld [vmem:[%s3 + $0x28] sm:$0xff]
  %v1961 = vld [vmem:[%s3 + $0x30] sm:$0xff]
  %v1962 = vld [vmem:[%s3 + $0x38] sm:$0xff]
  %v1963 = vld [vmem:[%s3 + $0x40] sm:$0xff]
  %v1964 = vld [vmem:[%s3 + $0x48] sm:$0xff]
  %v1965 = vld [vmem:[%s3 + $0x50] sm:$0xff]
  %v1966 = vld [vmem:[%s3 + $0x58] sm:$0xff]
  %v1967 = vld [vmem:[%s3 + $0x60] sm:$0xff]
  %v1968 = vld [vmem:[%s3 + $0x68] sm:$0xff]
  %v1969 = vld [vmem:[%s3 + $0x70] sm:$0xff]
  %v1970 = vld [vmem:[%s3 + $0x78] sm:$0xff]
  %v1971 = vld [vmem:[%s3 + $0x80] sm:$0xff]
  %v1972 = vld [vmem:[%s3 + $0x88] sm:$0xff]
  %v1973 = vld [vmem:[%s3 + $0x90] sm:$0xff]
  %v1974 = vld [vmem:[%s3 + $0x98] sm:$0xff]
  %v1975 = vld [vmem:[%s3 + $0xa0] sm:$0xff]
  %v1976 = vld [vmem:[%s3 + $0xa8] sm:$0xff]
  %v1977 = vld [vmem:[%s3 + $0xb0] sm:$0xff]
  %v1978 = vld [vmem:[%s3 + $0xb8] sm:$0xff]
  %v1979 = vld [vmem:[%s3 + $0xc0] sm:$0xff]
  %v1980 = vld [vmem:[%s3 + $0xc8] sm:$0xff]
  %v1981 = vld [vmem:[%s3 + $0xd0] sm:$0xff]
  %v1982 = vld [vmem:[%s3 + $0xd8] sm:$0xff]
  %v1983 = vld [vmem:[%s3 + $0xe0] sm:$0xff]
  %v1984 = vld [vmem:[%s3 + $0xe8] sm:$0xff]
  %v1985 = vld [vmem:[%s3 + $0xf0] sm:$0xff]
  %v1986 = vld [vmem:[%s3 + $0xf8] sm:$0xff]
  %v1987 = vld [vmem:[%s3 + $0x100] sm:$0xff]
  %v1988 = vld [vmem:[%s3 + $0x108] sm:$0xff]
  %v1989 = vld [vmem:[%s3 + $0x110] sm:$0xff]
  %v1990 = vld [vmem:[%s3 + $0x118] sm:$0xff]
  %v1991 = vld [vmem:[%s3 + $0x120] sm:$0xff]
  %v1992 = vld [vmem:[%s3 + $0x128] sm:$0xff]
  %v1993 = vld [vmem:[%s3 + $0x130] sm:$0xff]
  %v1994 = vld [vmem:[%s3 + $0x138] sm:$0xff]
  %v1995 = vld [vmem:[%s3 + $0x140] sm:$0xff]
  %v1996 = vld [vmem:[%s3 + $0x148] sm:$0xff]
  %v1997 = vld [vmem:[%s3 + $0x150] sm:$0xff]
  %v1998 = vld [vmem:[%s3 + $0x158] sm:$0xff]
  %v1999 = vld [vmem:[%s3 + $0x160] sm:$0xff]
  %v2000 = vld [vmem:[%s3 + $0x168] sm:$0xff]
  %v2001 = vld [vmem:[%s3 + $0x170] sm:$0xff]
  %v2002 = vld [vmem:[%s3 + $0x178] sm:$0xff]
  %v2003 = vld [vmem:[%s3 + $0x180] sm:$0xff]
  %v2004 = vld [vmem:[%s3 + $0x188] sm:$0xff]
  %v2005 = vld [vmem:[%s3 + $0x190] sm:$0xff]
  %v2006 = vld [vmem:[%s3 + $0x198] sm:$0xff]
  %v2007 = vld [vmem:[%s3 + $0x1a0] sm:$0xff]
  %v2008 = vld [vmem:[%s3 + $0x1a8] sm:$0xff]
  %v2009 = vld [vmem:[%s3 + $0x1b0] sm:$0xff]
  %v2010 = vld [vmem:[%s3 + $0x1b8] sm:$0xff]
  %v2011 = vld [vmem:[%s3 + $0x1c0] sm:$0xff]
  %v2012 = vld [vmem:[%s3 + $0x1c8] sm:$0xff]
  %v2013 = vld [vmem:[%s3 + $0x1d0] sm:$0xff]
  %v2014 = vld [vmem:[%s3 + $0x1d8] sm:$0xff]
  %v2015 = vld [vmem:[%s3 + $0x1e0] sm:$0xff]
  %v2016 = vld [vmem:[%s3 + $0x1e8] sm:$0xff]
  %v2017 = vld [vmem:[%s3 + $0x1f0] sm:$0xff]
  %v2018 = vld [vmem:[%s3 + $0x1f8] sm:$0xff]
  %v2019 = vld [vmem:[%s4] sm:$0x3]
  %v2021 = vlaneseq
  %v2022 = vshrl.u32 %v2021, 7
  %v2023 = vsub.s32 0, %v2022
  %v2024 = vrot.slane %v2019, %v2023
  %v2025 = vlaneseq
  %v2026 = vshrl.u32 %v2025, 7
  %v2027 = vsub.s32 1, %v2026
  %v2028 = vrot.slane %v2019, %v2027
  %v2095 = vunpack.c.l.b16 %v1955
  %v2096 = vunpack.c.h.b16 %v1955
  %v2097 = vunpack.c.l.b16 %v1956
  %v2098 = vunpack.c.h.b16 %v1956
  %v2099 = vunpack.c.l.b16 %v1957
  %v2100 = vunpack.c.h.b16 %v1957
  %v2101 = vunpack.c.l.b16 %v1958
  %v2102 = vunpack.c.h.b16 %v1958
  %v2103 = vunpack.c.l.b16 %v1959
  %v2104 = vunpack.c.h.b16 %v1959
  %v2105 = vunpack.c.l.b16 %v1960
  %v2106 = vunpack.c.h.b16 %v1960
  %v2107 = vunpack.c.l.b16 %v1961
  %v2108 = vunpack.c.h.b16 %v1961
  %v2109 = vunpack.c.l.b16 %v1962
  %v2110 = vunpack.c.h.b16 %v1962
  %v2111 = vunpack.c.l.b16 %v1963
  %v2112 = vunpack.c.h.b16 %v1963
  %v2113 = vunpack.c.l.b16 %v1964
  %v2114 = vunpack.c.h.b16 %v1964
  %v2115 = vunpack.c.l.b16 %v1965
  %v2116 = vunpack.c.h.b16 %v1965
  %v2117 = vunpack.c.l.b16 %v1966
  %v2118 = vunpack.c.h.b16 %v1966
  %v2119 = vunpack.c.l.b16 %v1967
  %v2120 = vunpack.c.h.b16 %v1967
  %v2121 = vunpack.c.l.b16 %v1968
  %v2122 = vunpack.c.h.b16 %v1968
  %v2123 = vunpack.c.l.b16 %v1969
  %v2124 = vunpack.c.h.b16 %v1969
  %v2125 = vunpack.c.l.b16 %v1970
  %v2126 = vunpack.c.h.b16 %v1970
  %v2127 = vunpack.c.l.b16 %v1971
  %v2128 = vunpack.c.h.b16 %v1971
  %v2129 = vunpack.c.l.b16 %v1972
  %v2130 = vunpack.c.h.b16 %v1972
  %v2131 = vunpack.c.l.b16 %v1973
  %v2132 = vunpack.c.h.b16 %v1973
  %v2133 = vunpack.c.l.b16 %v1974
  %v2134 = vunpack.c.h.b16 %v1974
  %v2135 = vunpack.c.l.b16 %v1975
  %v2136 = vunpack.c.h.b16 %v1975
  %v2137 = vunpack.c.l.b16 %v1976
  %v2138 = vunpack.c.h.b16 %v1976
  %v2139 = vunpack.c.l.b16 %v1977
  %v2140 = vunpack.c.h.b16 %v1977
  %v2141 = vunpack.c.l.b16 %v1978
  %v2142 = vunpack.c.h.b16 %v1978
  %v2143 = vunpack.c.l.b16 %v1979
  %v2144 = vunpack.c.h.b16 %v1979
  %v2145 = vunpack.c.l.b16 %v1980
  %v2146 = vunpack.c.h.b16 %v1980
  %v2147 = vunpack.c.l.b16 %v1981
  %v2148 = vunpack.c.h.b16 %v1981
  %v2149 = vunpack.c.l.b16 %v1982
  %v2150 = vunpack.c.h.b16 %v1982
  %v2151 = vunpack.c.l.b16 %v1983
  %v2152 = vunpack.c.h.b16 %v1983
  %v2153 = vunpack.c.l.b16 %v1984
  %v2154 = vunpack.c.h.b16 %v1984
  %v2155 = vunpack.c.l.b16 %v1985
  %v2156 = vunpack.c.h.b16 %v1985
  %v2157 = vunpack.c.l.b16 %v1986
  %v2158 = vunpack.c.h.b16 %v1986
  %v2159 = vunpack.c.l.b16 %v1987
  %v2160 = vunpack.c.h.b16 %v1987
  %v2161 = vunpack.c.l.b16 %v1988
  %v2162 = vunpack.c.h.b16 %v1988
  %v2163 = vunpack.c.l.b16 %v1989
  %v2164 = vunpack.c.h.b16 %v1989
  %v2165 = vunpack.c.l.b16 %v1990
  %v2166 = vunpack.c.h.b16 %v1990
  %v2167 = vunpack.c.l.b16 %v1991
  %v2168 = vunpack.c.h.b16 %v1991
  %v2169 = vunpack.c.l.b16 %v1992
  %v2170 = vunpack.c.h.b16 %v1992
  %v2171 = vunpack.c.l.b16 %v1993
  %v2172 = vunpack.c.h.b16 %v1993
  %v2173 = vunpack.c.l.b16 %v1994
  %v2174 = vunpack.c.h.b16 %v1994
  %v2175 = vunpack.c.l.b16 %v1995
  %v2176 = vunpack.c.h.b16 %v1995
  %v2177 = vunpack.c.l.b16 %v1996
  %v2178 = vunpack.c.h.b16 %v1996
  %v2179 = vunpack.c.l.b16 %v1997
  %v2180 = vunpack.c.h.b16 %v1997
  %v2181 = vunpack.c.l.b16 %v1998
  %v2182 = vunpack.c.h.b16 %v1998
  %v2183 = vunpack.c.l.b16 %v1999
  %v2184 = vunpack.c.h.b16 %v1999
  %v2185 = vunpack.c.l.b16 %v2000
  %v2186 = vunpack.c.h.b16 %v2000
  %v2187 = vunpack.c.l.b16 %v2001
  %v2188 = vunpack.c.h.b16 %v2001
  %v2189 = vunpack.c.l.b16 %v2002
  %v2190 = vunpack.c.h.b16 %v2002
  %v2191 = vunpack.c.l.b16 %v2003
  %v2192 = vunpack.c.h.b16 %v2003
  %v2193 = vunpack.c.l.b16 %v2004
  %v2194 = vunpack.c.h.b16 %v2004
  %v2195 = vunpack.c.l.b16 %v2005
  %v2196 = vunpack.c.h.b16 %v2005
  %v2197 = vunpack.c.l.b16 %v2006
  %v2198 = vunpack.c.h.b16 %v2006
  %v2199 = vunpack.c.l.b16 %v2007
  %v2200 = vunpack.c.h.b16 %v2007
  %v2201 = vunpack.c.l.b16 %v2008
  %v2202 = vunpack.c.h.b16 %v2008
  %v2203 = vunpack.c.l.b16 %v2009
  %v2204 = vunpack.c.h.b16 %v2009
  %v2205 = vunpack.c.l.b16 %v2010
  %v2206 = vunpack.c.h.b16 %v2010
  %v2207 = vunpack.c.l.b16 %v2011
  %v2208 = vunpack.c.h.b16 %v2011
  %v2209 = vunpack.c.l.b16 %v2012
  %v2210 = vunpack.c.h.b16 %v2012
  %v2211 = vunpack.c.l.b16 %v2013
  %v2212 = vunpack.c.h.b16 %v2013
  %v2213 = vunpack.c.l.b16 %v2014
  %v2214 = vunpack.c.h.b16 %v2014
  %v2215 = vunpack.c.l.b16 %v2015
  %v2216 = vunpack.c.h.b16 %v2015
  %v2217 = vunpack.c.l.b16 %v2016
  %v2218 = vunpack.c.h.b16 %v2016
  %v2219 = vunpack.c.l.b16 %v2017
  %v2220 = vunpack.c.h.b16 %v2017
  %v2221 = vunpack.c.l.b16 %v2018
  %v2222 = vunpack.c.h.b16 %v2018
  %v2223 = vpack.c.b16 %v2097, %v2095
  %v2224 = vpack.c.b16 %v2098, %v2096
  %v2225 = vpack.c.b16 %v2101, %v2099
  %v2226 = vpack.c.b16 %v2102, %v2100
  %v2227 = vpack.c.b16 %v2105, %v2103
  %v2228 = vpack.c.b16 %v2106, %v2104
  %v2229 = vpack.c.b16 %v2109, %v2107
  %v2230 = vpack.c.b16 %v2110, %v2108
  %v2231 = vpack.c.b16 %v2113, %v2111
  %v2232 = vpack.c.b16 %v2114, %v2112
  %v2233 = vpack.c.b16 %v2117, %v2115
  %v2234 = vpack.c.b16 %v2118, %v2116
  %v2235 = vpack.c.b16 %v2121, %v2119
  %v2236 = vpack.c.b16 %v2122, %v2120
  %v2237 = vpack.c.b16 %v2125, %v2123
  %v2238 = vpack.c.b16 %v2126, %v2124
  %v2239 = vpack.c.b16 %v2129, %v2127
  %v2240 = vpack.c.b16 %v2130, %v2128
  %v2241 = vpack.c.b16 %v2133, %v2131
  %v2242 = vpack.c.b16 %v2134, %v2132
  %v2243 = vpack.c.b16 %v2137, %v2135
  %v2244 = vpack.c.b16 %v2138, %v2136
  %v2245 = vpack.c.b16 %v2141, %v2139
  %v2246 = vpack.c.b16 %v2142, %v2140
  %v2247 = vpack.c.b16 %v2145, %v2143
  %v2248 = vpack.c.b16 %v2146, %v2144
  %v2249 = vpack.c.b16 %v2149, %v2147
  %v2250 = vpack.c.b16 %v2150, %v2148
  %v2251 = vpack.c.b16 %v2153, %v2151
  %v2252 = vpack.c.b16 %v2154, %v2152
  %v2253 = vpack.c.b16 %v2157, %v2155
  %v2254 = vpack.c.b16 %v2158, %v2156
  %v2255 = vpack.c.b16 %v2161, %v2159
  %v2256 = vpack.c.b16 %v2162, %v2160
  %v2257 = vpack.c.b16 %v2165, %v2163
  %v2258 = vpack.c.b16 %v2166, %v2164
  %v2259 = vpack.c.b16 %v2169, %v2167
  %v2260 = vpack.c.b16 %v2170, %v2168
  %v2261 = vpack.c.b16 %v2173, %v2171
  %v2262 = vpack.c.b16 %v2174, %v2172
  %v2263 = vpack.c.b16 %v2177, %v2175
  %v2264 = vpack.c.b16 %v2178, %v2176
  %v2265 = vpack.c.b16 %v2181, %v2179
  %v2266 = vpack.c.b16 %v2182, %v2180
  %v2267 = vpack.c.b16 %v2185, %v2183
  %v2268 = vpack.c.b16 %v2186, %v2184
  %v2269 = vpack.c.b16 %v2189, %v2187
  %v2270 = vpack.c.b16 %v2190, %v2188
  %v2271 = vpack.c.b16 %v2193, %v2191
  %v2272 = vpack.c.b16 %v2194, %v2192
  %v2273 = vpack.c.b16 %v2197, %v2195
  %v2274 = vpack.c.b16 %v2198, %v2196
  %v2275 = vpack.c.b16 %v2201, %v2199
  %v2276 = vpack.c.b16 %v2202, %v2200
  %v2277 = vpack.c.b16 %v2205, %v2203
  %v2278 = vpack.c.b16 %v2206, %v2204
  %v2279 = vpack.c.b16 %v2209, %v2207
  %v2280 = vpack.c.b16 %v2210, %v2208
  %v2281 = vpack.c.b16 %v2213, %v2211
  %v2282 = vpack.c.b16 %v2214, %v2212
  %v2283 = vpack.c.b16 %v2217, %v2215
  %v2284 = vpack.c.b16 %v2218, %v2216
  %v2285 = vpack.c.b16 %v2221, %v2219
  %v2286 = vpack.c.b16 %v2222, %v2220
  %2351 = vmatprep.subr.bf16.mxu0 %v2238
  %2352 = vmatpush1.bf16.msra.mxu0 %v2237
  %2353 = vmatprep.subr.bf16.mxu0 %v2236
  %2354 = vmatpush1.bf16.msra.mxu0 %v2235
  %2355 = vmatprep.subr.bf16.mxu0 %v2234
  %2356 = vmatpush1.bf16.msra.mxu0 %v2233
  %2357 = vmatprep.subr.bf16.mxu0 %v2232
  %2358 = vmatpush1.bf16.msra.mxu0 %v2231
  %2359 = vmatprep.subr.bf16.mxu0 %v2230
  %2360 = vmatpush1.bf16.msra.mxu0 %v2229
  %2361 = vmatprep.subr.bf16.mxu0 %v2228
  %2362 = vmatpush1.bf16.msra.mxu0 %v2227
  %2363 = vmatprep.subr.bf16.mxu0 %v2226
  %2364 = vmatpush1.bf16.msra.mxu0 %v2225
  %2365 = vmatprep.subr.bf16.mxu0 %v2224
  %2366 = vmatpush1.bf16.msra.mxu0 %v2223
  %2367 = vmatprep.subr.bf16.mxu0 %v2254
  %2368 = vmatpush2.bf16.msra.mxu0 %v2253
  %2369 = vmatprep.subr.bf16.mxu0 %v2252
  %2370 = vmatpush2.bf16.msra.mxu0 %v2251
  %2371 = vmatprep.subr.bf16.mxu0 %v2250
  %2372 = vmatpush2.bf16.msra.mxu0 %v2249
  %2373 = vmatprep.subr.bf16.mxu0 %v2248
  %2374 = vmatpush2.bf16.msra.mxu0 %v2247
  %2375 = vmatprep.subr.bf16.mxu0 %v2246
  %2376 = vmatpush2.bf16.msra.mxu0 %v2245
  %2377 = vmatprep.subr.bf16.mxu0 %v2244
  %2378 = vmatpush2.bf16.msra.mxu0 %v2243
  %2379 = vmatprep.subr.bf16.mxu0 %v2242
  %2380 = vmatpush2.bf16.msra.mxu0 %v2241
  %2381 = vmatprep.subr.bf16.mxu0 %v2240
  %2382 = vmatpush2.bf16.msra.mxu0 %v2239
  %2383 = vmatprep.mubr.bf16.mxu0 %v1952
  %2384 = vmatmul.mubr.bf16.gmra.mxu0 %v1951
  %v2385 = vpop.f32.mrf.mxu0
  %v2386 = vadd.f32 %v2024, %v2385
  %v2387 = vpop.f32.mrf.mxu0
  %v2388 = vadd.f32 %v2028, %v2387
  %v2389 = vpop.f32.mrf.mxu0
  %v2390 = vpop.f32.mrf.mxu0
  %2391 = vdwg.mxu0
  %2392 = vmatprep.subr.bf16.mxu0 %v2270
  %2393 = vmatpush1.bf16.msra.mxu0 %v2269
  %2394 = vmatprep.subr.bf16.mxu0 %v2268
  %2395 = vmatpush1.bf16.msra.mxu0 %v2267
  %2396 = vmatprep.subr.bf16.mxu0 %v2266
  %2397 = vmatpush1.bf16.msra.mxu0 %v2265
  %2398 = vmatprep.subr.bf16.mxu0 %v2264
  %2399 = vmatpush1.bf16.msra.mxu0 %v2263
  %2400 = vmatprep.subr.bf16.mxu0 %v2262
  %2401 = vmatpush1.bf16.msra.mxu0 %v2261
  %2402 = vmatprep.subr.bf16.mxu0 %v2260
  %2403 = vmatpush1.bf16.msra.mxu0 %v2259
  %2404 = vmatprep.subr.bf16.mxu0 %v2258
  %2405 = vmatpush1.bf16.msra.mxu0 %v2257
  %2406 = vmatprep.subr.bf16.mxu0 %v2256
  %2407 = vmatpush1.bf16.msra.mxu0 %v2255
  %2408 = vmatprep.subr.bf16.mxu0 %v2286
  %2409 = vmatpush2.bf16.msra.mxu0 %v2285
  %2410 = vmatprep.subr.bf16.mxu0 %v2284
  %2411 = vmatpush2.bf16.msra.mxu0 %v2283
  %2412 = vmatprep.subr.bf16.mxu0 %v2282
  %2413 = vmatpush2.bf16.msra.mxu0 %v2281
  %2414 = vmatprep.subr.bf16.mxu0 %v2280
  %2415 = vmatpush2.bf16.msra.mxu0 %v2279
  %2416 = vmatprep.subr.bf16.mxu0 %v2278
  %2417 = vmatpush2.bf16.msra.mxu0 %v2277
  %2418 = vmatprep.subr.bf16.mxu0 %v2276
  %2419 = vmatpush2.bf16.msra.mxu0 %v2275
  %2420 = vmatprep.subr.bf16.mxu0 %v2274
  %2421 = vmatpush2.bf16.msra.mxu0 %v2273
  %2422 = vmatprep.subr.bf16.mxu0 %v2272
  %2423 = vmatpush2.bf16.msra.mxu0 %v2271
  %2424 = vmatprep.mubr.bf16.mxu0 %v1954
  %2425 = vmatmul.mubr.bf16.gmra.mxu0 %v1953
  %v2426 = vpop.f32.mrf.mxu0
  %v2427 = vadd.f32 %v2386, %v2426
  %v2428 = vpop.f32.mrf.mxu0
  %v2429 = vadd.f32 %v2388, %v2428
  %v2430 = vpop.f32.mrf.mxu0
  %v2431 = vpop.f32.mrf.mxu0
  %2432 = vdwg.mxu0
  %v2433 = vmax.f32 %v2427, 0.0
  %v2434 = vmax.f32 %v2429, 0.0
  %v2435 = vpack.c.bf16 %v2433, %v2433
  %v2436 = vpack.c.bf16 %v2434, %v2434
  %v2437 = vld [vmem:[%s5] sm:$0xf]
  %v2438 = vld [vmem:[%s5 + $0x4] sm:$0xf]
  %v2439 = vld [vmem:[%s5 + $0x8] sm:$0xf]
  %v2440 = vld [vmem:[%s5 + $0xc] sm:$0xf]
  %v2441 = vld [vmem:[%s5 + $0x10] sm:$0xf]
  %v2442 = vld [vmem:[%s5 + $0x14] sm:$0xf]
  %v2443 = vld [vmem:[%s5 + $0x18] sm:$0xf]
  %v2444 = vld [vmem:[%s5 + $0x1c] sm:$0xf]
  %v2445 = vld [vmem:[%s5 + $0x20] sm:$0xf]
  %v2446 = vld [vmem:[%s5 + $0x24] sm:$0xf]
  %v2447 = vld [vmem:[%s5 + $0x28] sm:$0xf]
  %v2448 = vld [vmem:[%s5 + $0x2c] sm:$0xf]
  %v2449 = vld [vmem:[%s5 + $0x30] sm:$0xf]
  %v2450 = vld [vmem:[%s5 + $0x34] sm:$0xf]
  %v2451 = vld [vmem:[%s5 + $0x38] sm:$0xf]
  %v2452 = vld [vmem:[%s5 + $0x3c] sm:$0xf]
  %v2453 = vld [vmem:[%s5 + $0x40] sm:$0xf]
  %v2454 = vld [vmem:[%s5 + $0x44] sm:$0xf]
  %v2455 = vld [vmem:[%s5 + $0x48] sm:$0xf]
  %v2456 = vld [vmem:[%s5 + $0x4c] sm:$0xf]
  %v2457 = vld [vmem:[%s5 + $0x50] sm:$0xf]
  %v2458 = vld [vmem:[%s5 + $0x54] sm:$0xf]
  %v2459 = vld [vmem:[%s5 + $0x58] sm:$0xf]
  %v2460 = vld [vmem:[%s5 + $0x5c] sm:$0xf]
  %v2461 = vld [vmem:[%s5 + $0x60] sm:$0xf]
  %v2462 = vld [vmem:[%s5 + $0x64] sm:$0xf]
  %v2463 = vld [vmem:[%s5 + $0x68] sm:$0xf]
  %v2464 = vld [vmem:[%s5 + $0x6c] sm:$0xf]
  %v2465 = vld [vmem:[%s5 + $0x70] sm:$0xf]
  %v2466 = vld [vmem:[%s5 + $0x74] sm:$0xf]
  %v2467 = vld [vmem:[%s5 + $0x78] sm:$0xf]
  %v2468 = vld [vmem:[%s5 + $0x7c] sm:$0xf]
  %v2469 = vld [vmem:[%s6] sm:$0x1]
  %v2471 = vlaneseq
  %v2472 = vshrl.u32 %v2471, 7
  %v2473 = vsub.s32 0, %v2472
  %v2474 = vrot.slane %v2469, %v2473
  %v2508 = vunpack.c.l.b16 %v2437
  %v2509 = vunpack.c.l.b16 %v2438
  %v2510 = vunpack.c.l.b16 %v2439
  %v2511 = vunpack.c.l.b16 %v2440
  %v2512 = vunpack.c.l.b16 %v2441
  %v2513 = vunpack.c.l.b16 %v2442
  %v2514 = vunpack.c.l.b16 %v2443
  %v2515 = vunpack.c.l.b16 %v2444
  %v2516 = vunpack.c.l.b16 %v2445
  %v2517 = vunpack.c.l.b16 %v2446
  %v2518 = vunpack.c.l.b16 %v2447
  %v2519 = vunpack.c.l.b16 %v2448
  %v2520 = vunpack.c.l.b16 %v2449
  %v2521 = vunpack.c.l.b16 %v2450
  %v2522 = vunpack.c.l.b16 %v2451
  %v2523 = vunpack.c.l.b16 %v2452
  %v2524 = vunpack.c.l.b16 %v2453
  %v2525 = vunpack.c.l.b16 %v2454
  %v2526 = vunpack.c.l.b16 %v2455
  %v2527 = vunpack.c.l.b16 %v2456
  %v2528 = vunpack.c.l.b16 %v2457
  %v2529 = vunpack.c.l.b16 %v2458
  %v2530 = vunpack.c.l.b16 %v2459
  %v2531 = vunpack.c.l.b16 %v2460
  %v2532 = vunpack.c.l.b16 %v2461
  %v2533 = vunpack.c.l.b16 %v2462
  %v2534 = vunpack.c.l.b16 %v2463
  %v2535 = vunpack.c.l.b16 %v2464
  %v2536 = vunpack.c.l.b16 %v2465
  %v2537 = vunpack.c.l.b16 %v2466
  %v2538 = vunpack.c.l.b16 %v2467
  %v2539 = vunpack.c.l.b16 %v2468
  %v2540 = vpack.c.b16 %v2509, %v2508
  %v2541 = vpack.c.b16 %v2511, %v2510
  %v2542 = vpack.c.b16 %v2513, %v2512
  %v2543 = vpack.c.b16 %v2515, %v2514
  %v2544 = vpack.c.b16 %v2517, %v2516
  %v2545 = vpack.c.b16 %v2519, %v2518
  %v2546 = vpack.c.b16 %v2521, %v2520
  %v2547 = vpack.c.b16 %v2523, %v2522
  %v2548 = vpack.c.b16 %v2525, %v2524
  %v2549 = vpack.c.b16 %v2527, %v2526
  %v2550 = vpack.c.b16 %v2529, %v2528
  %v2551 = vpack.c.b16 %v2531, %v2530
  %v2552 = vpack.c.b16 %v2533, %v2532
  %v2553 = vpack.c.b16 %v2535, %v2534
  %v2554 = vpack.c.b16 %v2537, %v2536
  %v2555 = vpack.c.b16 %v2539, %v2538
  %2572 = vmatprep.subr.bf16.mxu0 0
  %2573 = vmatpush1.bf16.msra.mxu0 %v2547
  %2574 = vmatprep.subr.bf16.mxu0 0
  %2575 = vmatpush1.bf16.msra.mxu0 %v2546
  %2576 = vmatprep.subr.bf16.mxu0 0
  %2577 = vmatpush1.bf16.msra.mxu0 %v2545
  %2578 = vmatprep.subr.bf16.mxu0 0
  %2579 = vmatpush1.bf16.msra.mxu0 %v2544
  %2580 = vmatprep.subr.bf16.mxu0 0
  %2581 = vmatpush1.bf16.msra.mxu0 %v2543
  %2582 = vmatprep.subr.bf16.mxu0 0
  %2583 = vmatpush1.bf16.msra.mxu0 %v2542
  %2584 = vmatprep.subr.bf16.mxu0 0
  %2585 = vmatpush1.bf16.msra.mxu0 %v2541
  %2586 = vmatprep.subr.bf16.mxu0 0
  %2587 = vmatpush1.bf16.msra.mxu0 %v2540
  %2588 = vmatprep.subr.bf16.mxu0 0
  %2589 = vmatpush2.bf16.msra.mxu0 %v2555
  %2590 = vmatprep.subr.bf16.mxu0 0
  %2591 = vmatpush2.bf16.msra.mxu0 %v2554
  %2592 = vmatprep.subr.bf16.mxu0 0
  %2593 = vmatpush2.bf16.msra.mxu0 %v2553
  %2594 = vmatprep.subr.bf16.mxu0 0
  %2595 = vmatpush2.bf16.msra.mxu0 %v2552
  %2596 = vmatprep.subr.bf16.mxu0 0
  %2597 = vmatpush2.bf16.msra.mxu0 %v2551
  %2598 = vmatprep.subr.bf16.mxu0 0
  %2599 = vmatpush2.bf16.msra.mxu0 %v2550
  %2600 = vmatprep.subr.bf16.mxu0 0
  %2601 = vmatpush2.bf16.msra.mxu0 %v2549
  %2602 = vmatprep.subr.bf16.mxu0 0
  %2603 = vmatpush2.bf16.msra.mxu0 %v2548
  %2604 = vmatprep.mubr.bf16.mxu0 %v2436
  %2605 = vmatmul.mubr.bf16.gmra.mxu0 %v2435
  %v2606 = vpop.f32.mrf.mxu0
  %v2607 = vadd.f32 %v2474, %v2606
  %v2608 = vpop.f32.mrf.mxu0
  %v2609 = vpop.f32.mrf.mxu0
  %v2610 = vpop.f32.mrf.mxu0
  %2611 = vdwg.mxu0
  %v2612 = vmax.f32 %v2607, 0.0
  %v2613 = vpack.c.bf16 %v2612, %v2612
  %v2614 = vld [vmem:[%s7] sm:$0xf]
  %v2615 = vld [vmem:[%s7 + $0x4] sm:$0xf]
  %v2616 = vld [vmem:[%s7 + $0x8] sm:$0xf]
  %v2617 = vld [vmem:[%s7 + $0xc] sm:$0xf]
  %v2618 = vld [vmem:[%s7 + $0x10] sm:$0xf]
  %v2619 = vld [vmem:[%s7 + $0x14] sm:$0xf]
  %v2620 = vld [vmem:[%s7 + $0x18] sm:$0xf]
  %v2621 = vld [vmem:[%s7 + $0x1c] sm:$0xf]
  %v2622 = vld [vmem:[%s7 + $0x20] sm:$0xf]
  %v2623 = vld [vmem:[%s7 + $0x24] sm:$0xf]
  %v2624 = vld [vmem:[%s7 + $0x28] sm:$0xf]
  %v2625 = vld [vmem:[%s7 + $0x2c] sm:$0xf]
  %v2626 = vld [vmem:[%s7 + $0x30] sm:$0xf]
  %v2627 = vld [vmem:[%s7 + $0x34] sm:$0xf]
  %v2628 = vld [vmem:[%s7 + $0x38] sm:$0xf]
  %v2629 = vld [vmem:[%s7 + $0x3c] sm:$0xf]
  %v2630 = vld [vmem:[%s8] sm:$0x1]
  %v2632 = vlaneseq
  %v2633 = vshrl.u32 %v2632, 7
  %v2634 = vsub.s32 0, %v2633
  %v2635 = vrot.slane %v2630, %v2634
  %v2653 = vunpack.c.l.b16 %v2614
  %v2654 = vunpack.c.l.b16 %v2615
  %v2655 = vunpack.c.l.b16 %v2616
  %v2656 = vunpack.c.l.b16 %v2617
  %v2657 = vunpack.c.l.b16 %v2618
  %v2658 = vunpack.c.l.b16 %v2619
  %v2659 = vunpack.c.l.b16 %v2620
  %v2660 = vunpack.c.l.b16 %v2621
  %v2661 = vunpack.c.l.b16 %v2622
  %v2662 = vunpack.c.l.b16 %v2623
  %v2663 = vunpack.c.l.b16 %v2624
  %v2664 = vunpack.c.l.b16 %v2625
  %v2665 = vunpack.c.l.b16 %v2626
  %v2666 = vunpack.c.l.b16 %v2627
  %v2667 = vunpack.c.l.b16 %v2628
  %v2668 = vunpack.c.l.b16 %v2629
  %v2669 = vpack.c.b16 %v2654, %v2653
  %v2670 = vpack.c.b16 %v2656, %v2655
  %v2671 = vpack.c.b16 %v2658, %v2657
  %v2672 = vpack.c.b16 %v2660, %v2659
  %v2673 = vpack.c.b16 %v2662, %v2661
  %v2674 = vpack.c.b16 %v2664, %v2663
  %v2675 = vpack.c.b16 %v2666, %v2665
  %v2676 = vpack.c.b16 %v2668, %v2667
  %2685 = vmatprep.subr.bf16.mxu0 0
  %2686 = vmatpush1.bf16.msra.mxu0 %v2676
  %2687 = vmatprep.subr.bf16.mxu0 0
  %2688 = vmatpush1.bf16.msra.mxu0 %v2675
  %2689 = vmatprep.subr.bf16.mxu0 0
  %2690 = vmatpush1.bf16.msra.mxu0 %v2674
  %2691 = vmatprep.subr.bf16.mxu0 0
  %2692 = vmatpush1.bf16.msra.mxu0 %v2673
  %2693 = vmatprep.subr.bf16.mxu0 0
  %2694 = vmatpush1.bf16.msra.mxu0 %v2672
  %2695 = vmatprep.subr.bf16.mxu0 0
  %2696 = vmatpush1.bf16.msra.mxu0 %v2671
  %2697 = vmatprep.subr.bf16.mxu0 0
  %2698 = vmatpush1.bf16.msra.mxu0 %v2670
  %2699 = vmatprep.subr.bf16.mxu0 0
  %2700 = vmatpush1.bf16.msra.mxu0 %v2669
  %2701 = vmatprep.subr.bf16.mxu0 0
  %2702 = vmatpush2.bf16.msra.mxu0 0
  %2703 = vmatprep.subr.bf16.mxu0 0
  %2704 = vmatpush2.bf16.msra.mxu0 0
  %2705 = vmatprep.subr.bf16.mxu0 0
  %2706 = vmatpush2.bf16.msra.mxu0 0
  %2707 = vmatprep.subr.bf16.mxu0 0
  %2708 = vmatpush2.bf16.msra.mxu0 0
  %2709 = vmatprep.subr.bf16.mxu0 0
  %2710 = vmatpush2.bf16.msra.mxu0 0
  %2711 = vmatprep.subr.bf16.mxu0 0
  %2712 = vmatpush2.bf16.msra.mxu0 0
  %2713 = vmatprep.subr.bf16.mxu0 0
  %2714 = vmatpush2.bf16.msra.mxu0 0
  %2715 = vmatprep.subr.bf16.mxu0 0
  %2716 = vmatpush2.bf16.msra.mxu0 0
  %2717 = vmatprep.mubr.bf16.mxu0 0
  %2718 = vmatmul.mubr.bf16.gmra.mxu0 %v2613
  %v2719 = vpop.f32.mrf.mxu0
  %v2720 = vadd.f32 %v2635, %v2719
  %v2721 = vpop.f32.mrf.mxu0
  %v2722 = vpop.f32.mrf.mxu0
  %v2723 = vpop.f32.mrf.mxu0
  %2724 = vdwg.mxu0
  %v2725 = vmax.f32 %v2720, 0.0
  %v2726 = vpack.c.bf16 %v2725, %v2725
  %v2727 = vld [vmem:[%s9] sm:$0xf]
  %v2728 = vld [vmem:[%s9 + $0x4] sm:$0xf]
  %v2729 = vld [vmem:[%s9 + $0x8] sm:$0xf]
  %v2730 = vld [vmem:[%s9 + $0xc] sm:$0xf]
  %v2731 = vld [vmem:[%s9 + $0x10] sm:$0xf]
  %v2732 = vld [vmem:[%s9 + $0x14] sm:$0xf]
  %v2733 = vld [vmem:[%s9 + $0x18] sm:$0xf]
  %v2734 = vld [vmem:[%s9 + $0x1c] sm:$0xf]
  %v2735 = vld [vmem:[%s10] sm:$0x1]
  %v2737 = vlaneseq
  %v2738 = vshrl.u32 %v2737, 7
  %v2739 = vsub.s32 0, %v2738
  %v2740 = vrot.slane %v2735, %v2739
  %v2750 = vunpack.c.l.b16 %v2727
  %v2751 = vunpack.c.l.b16 %v2728
  %v2752 = vunpack.c.l.b16 %v2729
  %v2753 = vunpack.c.l.b16 %v2730
  %v2754 = vunpack.c.l.b16 %v2731
  %v2755 = vunpack.c.l.b16 %v2732
  %v2756 = vunpack.c.l.b16 %v2733
  %v2757 = vunpack.c.l.b16 %v2734
  %v2758 = vpack.c.b16 %v2751, %v2750
  %v2759 = vpack.c.b16 %v2753, %v2752
  %v2760 = vpack.c.b16 %v2755, %v2754
  %v2761 = vpack.c.b16 %v2757, %v2756
  %vm2766 = vcmask 523264
  %v2768 = vsel %vm2766, %v2726, 0
  %2770 = vmatprep.subr.bf16.mxu0 0
  %2771 = vmatpush1.bf16.msra.mxu0 0
  %2772 = vmatprep.subr.bf16.mxu0 0
  %2773 = vmatpush1.bf16.msra.mxu0 0
  %2774 = vmatprep.subr.bf16.mxu0 0
  %2775 = vmatpush1.bf16.msra.mxu0 0
  %2776 = vmatprep.subr.bf16.mxu0 0
  %2777 = vmatpush1.bf16.msra.mxu0 0
  %2778 = vmatprep.subr.bf16.mxu0 0
  %2779 = vmatpush1.bf16.msra.mxu0 %v2761
  %2780 = vmatprep.subr.bf16.mxu0 0
  %2781 = vmatpush1.bf16.msra.mxu0 %v2760
  %2782 = vmatprep.subr.bf16.mxu0 0
  %2783 = vmatpush1.bf16.msra.mxu0 %v2759
  %2784 = vmatprep.subr.bf16.mxu0 0
  %2785 = vmatpush1.bf16.msra.mxu0 %v2758
  %2786 = vmatprep.subr.bf16.mxu0 0
  %2787 = vmatpush2.bf16.msra.mxu0 0
  %2788 = vmatprep.subr.bf16.mxu0 0
  %2789 = vmatpush2.bf16.msra.mxu0 0
  %2790 = vmatprep.subr.bf16.mxu0 0
  %2791 = vmatpush2.bf16.msra.mxu0 0
  %2792 = vmatprep.subr.bf16.mxu0 0
  %2793 = vmatpush2.bf16.msra.mxu0 0
  %2794 = vmatprep.subr.bf16.mxu0 0
  %2795 = vmatpush2.bf16.msra.mxu0 0
  %2796 = vmatprep.subr.bf16.mxu0 0
  %2797 = vmatpush2.bf16.msra.mxu0 0
  %2798 = vmatprep.subr.bf16.mxu0 0
  %2799 = vmatpush2.bf16.msra.mxu0 0
  %2800 = vmatprep.subr.bf16.mxu0 0
  %2801 = vmatpush2.bf16.msra.mxu0 0
  %2802 = vmatprep.mubr.bf16.mxu0 0
  %2803 = vmatmul.mubr.bf16.gmra.mxu0 %v2768
  %v2804 = vpop.f32.mrf.mxu0
  %v2805 = vadd.f32 %v2740, %v2804
  %v2806 = vpop.f32.mrf.mxu0
  %v2807 = vpop.f32.mrf.mxu0
  %v2808 = vpop.f32.mrf.mxu0
  %2809 = vdwg.mxu0
  %v2810 = vmax.f32 %v2805, 0.0
  %v2811 = vpack.c.bf16 %v2810, %v2810
  %v2812 = vld [vmem:[%s11] sm:$0xf]
  %v2813 = vld [vmem:[%s11 + $0x4] sm:$0xf]
  %v2814 = vld [vmem:[%s11 + $0x8] sm:$0xf]
  %v2815 = vld [vmem:[%s11 + $0xc] sm:$0xf]
  %v2816 = vld [vmem:[%s12] sm:$0x1]
  %v2818 = vlaneseq
  %v2819 = vshrl.u32 %v2818, 7
  %v2820 = vsub.s32 0, %v2819
  %v2821 = vrot.slane %v2816, %v2820
  %v2827 = vunpack.c.l.b16 %v2812
  %v2828 = vunpack.c.l.b16 %v2813
  %v2829 = vunpack.c.l.b16 %v2814
  %v2830 = vunpack.c.l.b16 %v2815
  %v2831 = vpack.c.b16 %v2828, %v2827
  %v2832 = vpack.c.b16 %v2830, %v2829
  %vm2835 = vcmask 261120
  %v2837 = vsel %vm2835, %v2811, 0
  %2839 = vmatprep.subr.bf16.mxu0 0
  %2840 = vmatpush1.bf16.msra.mxu0 0
  %2841 = vmatprep.subr.bf16.mxu0 0
  %2842 = vmatpush1.bf16.msra.mxu0 0
  %2843 = vmatprep.subr.bf16.mxu0 0
  %2844 = vmatpush1.bf16.msra.mxu0 0
  %2845 = vmatprep.subr.bf16.mxu0 0
  %2846 = vmatpush1.bf16.msra.mxu0 0
  %2847 = vmatprep.subr.bf16.mxu0 0
  %2848 = vmatpush1.bf16.msra.mxu0 0
  %2849 = vmatprep.subr.bf16.mxu0 0
  %2850 = vmatpush1.bf16.msra.mxu0 0
  %2851 = vmatprep.subr.bf16.mxu0 0
  %2852 = vmatpush1.bf16.msra.mxu0 %v2832
  %2853 = vmatprep.subr.bf16.mxu0 0
  %2854 = vmatpush1.bf16.msra.mxu0 %v2831
  %2855 = vmatprep.subr.bf16.mxu0 0
  %2856 = vmatpush2.bf16.msra.mxu0 0
  %2857 = vmatprep.subr.bf16.mxu0 0
  %2858 = vmatpush2.bf16.msra.mxu0 0
  %2859 = vmatprep.subr.bf16.mxu0 0
  %2860 = vmatpush2.bf16.msra.mxu0 0
  %2861 = vmatprep.subr.bf16.mxu0 0
  %2862 = vmatpush2.bf16.msra.mxu0 0
  %2863 = vmatprep.subr.bf16.mxu0 0
  %2864 = vmatpush2.bf16.msra.mxu0 0
  %2865 = vmatprep.subr.bf16.mxu0 0
  %2866 = vmatpush2.bf16.msra.mxu0 0
  %2867 = vmatprep.subr.bf16.mxu0 0
  %2868 = vmatpush2.bf16.msra.mxu0 0
  %2869 = vmatprep.subr.bf16.mxu0 0
  %2870 = vmatpush2.bf16.msra.mxu0 0
  %2871 = vmatprep.mubr.bf16.mxu0 0
  %2872 = vmatmul.mubr.bf16.gmra.mxu0 %v2837
  %v2873 = vpop.f32.mrf.mxu0
  %v2874 = vadd.f32 %v2821, %v2873
  %v2875 = vpop.f32.mrf.mxu0
  %v2876 = vpop.f32.mrf.mxu0
  %v2877 = vpop.f32.mrf.mxu0
  %2878 = vdwg.mxu0
  %vm2879 = vcmask 15360
  %v2880 = vsel %vm2879, %v2874, -inf
  %2881 = vmax.xlane.f32.xlu0 %v2880
  %v2882 = vpop.xlane.xlu0 %2881
  %v2883 = vsub.f32 %v2874, %v2882
  %v2884 = vmul.f32 %v2883, 1.442695
  %v2885 = vpow.pop %v2884
  %v2886 = vsel %vm2879, %v2885, 0.0
  %2887 = vadd.xlane.f32.xlu0 %v2886
  %v2888 = vpop.xlane.xlu0 %2887
  %v2889 = vrcp.pop %v2888
  %v2890 = vmul.f32 %v2885, %v2889
  %2891 = vst.msk [vmem:[%s13] sm:$0xff] %vm2879, %v2890
  // Predicated region
  $region54: #{gnet_mlp_forward.1} parent=0 // pred_check
    _
  $region55: #{gnet_mlp_forward.1} parent=0 // pred_check_branch
    %2893 = sbr.rel (0) target = $region57
  $region56: #{gnet_mlp_forward.1} parent=0 // pred_region
    _
  $region57: #{gnet_mlp_forward.1} parent=0 // pred_fallthru
    _
  // Predicated region
  $region58: #{gnet_mlp_forward.1} parent=0 // pred_check
    _
  $region59: #{gnet_mlp_forward.1} parent=0 // pred_check_branch
    %2895 = sbr.rel (0) target = $region61
  $region60: #{gnet_mlp_forward.1} parent=0 // pred_region
    _
  $region61: #{gnet_mlp_forward.1} parent=0 // pred_fallthru
    _

</llo_original>
